<compile_context>
chip_gen: v6e
topology: v6e:2x2x1
jax: 0.10.0
libtpu: 0.0.40
codegen_flags: <defaults>
</compile_context>

<pallas_src>
import functools

import jax
import jax.numpy as jnp
from jax.experimental import pallas as pl
from jax.experimental.pallas import tpu as pltpu


def _round_up(x, m):
    return (x + m - 1) // m * m


def _fused_dncnn_kernel(x_ref, masks_ref, *refs, num_layers, K, H, W, Cp):
    """Fused DnCNN forward for one patch.

    x_ref     : (1, Cp, L)          input patch, channel-padded, spatially flat
    masks_ref : (num_layers+1, 1, L) valid-window masks after each valid conv
    refs      : w_0, b_0, ..., w_{num_layers}, b_{num_layers}, w_final, b_final,
                o_ref, ext_ref
                w_i : (Cp, K*K*Cp)   b_i : (Cp, 1)
                w_f : (1,  K*K*Cp)   b_f : (1, 1)
    o_ref     : (1, 1, L)
    ext_ref   : VMEM scratch (Cp, 3*L)  = [zeros | activation | zeros]
    """
    ext_ref = refs[-1]
    o_ref = refs[-2]
    wb = refs[:-2]
    L = H * W

    # Zero the staging buffer once; the left/right L-wide borders stay zero and
    # provide the implicit zero padding for the final (padding=1) conv.
    ext_ref[...] = jnp.zeros((Cp, 3 * L), jnp.float32)

    def conv(act, w_ref, b_ref, offsets, relu):
        # act: (Cp, L).  Stage into the zero-bordered buffer, gather the K*K
        # shifted taps as rows of the im2col matrix (K*K*Cp, L), then a single
        # MXU matmul against the pre-flattened weights.
        ext_ref[:, L:2 * L] = act
        taps = [ext_ref[:, L + off:2 * L + off] for off in offsets]
        patches = jnp.concatenate(taps, axis=0)                 # (K*K*Cp, L)
        out = jnp.dot(w_ref[...], patches,
                      preferred_element_type=jnp.float32)       # (Cout, L)
        out = out + b_ref[...]                                  # (Cout,1) bcast
        if relu:
            out = jnp.maximum(out, 0.0)
        return out

    act = x_ref[0].astype(jnp.float32)                          # (Cp, L)

    # init conv + main convs: valid KxK conv + ReLU; zero everything outside
    # the shrinking valid window so shifted reads of later layers (and the
    # final conv's padding) see zeros there.
    offs_valid = [kh * W + kw for kh in range(K) for kw in range(K)]
    for layer in range(num_layers + 1):
        w_ref, b_ref = wb[2 * layer], wb[2 * layer + 1]
        out = conv(act, w_ref, b_ref, offs_valid, relu=True)
        act = out * masks_ref[layer]                            # (1,L) bcast

    # final conv: padding=1 (hardcoded in the PyTorch module), no ReLU.
    offs_final = [(kh - 1) * W + (kw - 1) for kh in range(K) for kw in range(K)]
    y = conv(act, wb[-2], wb[-1], offs_final, relu=False)       # (1, L)
    o_ref[0] = y.astype(o_ref.dtype)


def _pack_w(w, cin_pad, cout_pad):
    """(KH,KW,Cin,Cout) -> (cout_pad, KH*KW*cin_pad), rows ordered (kh,kw,ci)."""
    KH, KW, cin, cout = w.shape
    w = jnp.pad(w, ((0, 0), (0, 0), (0, cin_pad - cin), (0, cout_pad - cout)))
    return jnp.transpose(w, (3, 0, 1, 2)).reshape(cout_pad, KH * KW * cin_pad)


def _pack_b(b, cout_pad):
    b = jnp.reshape(b, (-1,))
    b = jnp.pad(b, (0, cout_pad - b.shape[0]))
    return b.reshape(cout_pad, 1)


def dncnn_forward(patches_nchw, params, est_type='direct'):
    """Mirrors dncnnPatchBased_patchLoss.forward. patches_nchw: (N, 1, H, W)."""
    N, _, H, W = patches_nchw.shape
    w0 = params['init'][0]
    K = w0.shape[0]
    C = w0.shape[3]
    num_layers = len(params['main'])
    Cp = _round_up(C, 8)
    L = H * W

    # Input: flatten spatially, pad channel axis to Cp sublane rows.
    x = patches_nchw.reshape(N, 1, L).astype(jnp.float32)
    x = jnp.pad(x, ((0, 0), (0, Cp - 1), (0, 0)))               # (N, Cp, L)

    # Pre-flattened / padded weights and biases (one im2col matmul per layer).
    packed = [_pack_w(params['init'][0], Cp, Cp), _pack_b(params['init'][1], Cp)]
    for (w, b) in params['main']:
        packed += [_pack_w(w, Cp, Cp), _pack_b(b, Cp)]
    packed += [_pack_w(params['final'][0], Cp, 1), _pack_b(params['final'][1], 1)]

    # Valid-window masks after each valid conv (computed once, outside kernel).
    masks = []
    hv, wv = H, W
    for _ in range(num_layers + 1):
        hv, wv = hv - (K - 1), wv - (K - 1)
        m = (jnp.arange(H)[:, None] < hv) & (jnp.arange(W)[None, :] < wv)
        masks.append(m.astype(jnp.float32).reshape(1, L))
    masks = jnp.stack(masks, axis=0)                            # (nl+1, 1, L)

    kern = functools.partial(_fused_dncnn_kernel, num_layers=num_layers,
                             K=K, H=H, W=W, Cp=Cp)

    in_specs = [
        pl.BlockSpec((1, Cp, L), lambda n: (n, 0, 0)),
        pl.BlockSpec((num_layers + 1, 1, L), lambda n: (0, 0, 0)),
    ]
    in_specs += [pl.BlockSpec(p.shape, lambda n: (0, 0)) for p in packed]

    y_flat = pl.pallas_call(
        kern,
        out_shape=jax.ShapeDtypeStruct((N, 1, L), jnp.float32),
        grid=(N,),
        in_specs=in_specs,
        out_specs=pl.BlockSpec((1, 1, L), lambda n: (n, 0, 0)),
        scratch_shapes=[pltpu.VMEM((Cp, 3 * L), jnp.float32)],
        compiler_params=pltpu.CompilerParams(
            dimension_semantics=("parallel",)),
    )(x, masks, *packed)

    # Final spatial size: (num_layers+1) valid convs shrink by K-1 each, the
    # final conv uses padding=1 exactly as the PyTorch module does.
    Hf = H - (num_layers + 1) * (K - 1) + 2 - (K - 1)
    Wf = W - (num_layers + 1) * (K - 1) + 2 - (K - 1)
    y = y_flat.reshape(N, 1, H, W)[:, :, :Hf, :Wf]

    if est_type == 'direct':
        return y
    elif est_type == 'residual':
        # TODO(synk): like the PyTorch module, this only broadcasts when the
        # spatial shapes line up (valid convs shrink y relative to patches).
        return patches_nchw - y
    raise ValueError(est_type)


def init_params(key, num_layers, num_channels, filter_size):
    """Deterministic synthetic parameters (same shapes as the PyTorch module)."""
    params = {}
    k = key

    def make(k, kh, kw, cin, cout):
        k, kw_key, kb_key = jax.random.split(k, 3)
        scale = 1.0 / jnp.sqrt(jnp.float32(kh * kw * cin))
        w = jax.random.normal(kw_key, (kh, kw, cin, cout), jnp.float32) * scale
        b = jax.random.normal(kb_key, (1, cout), jnp.float32) * 0.01
        return k, (w, b)

    k, params['init'] = make(k, filter_size, filter_size, 1, num_channels)
    main = []
    for _ in range(num_layers):
        k, p = make(k, filter_size, filter_size, num_channels, num_channels)
        main.append(p)
    params['main'] = main
    k, params['final'] = make(k, filter_size, filter_size, num_channels, 1)
    return params


def dncnn_forward_ref(patches_nchw, params, est_type='direct'):
    """Pure-JAX reference using lax.conv (for correctness check)."""
    def conv(x, w, b, pad, relu):
        y = jax.lax.conv_general_dilated(
            x, w, window_strides=(1, 1), padding=[(pad, pad), (pad, pad)],
            dimension_numbers=('NHWC', 'HWIO', 'NHWC')) + b[None]
        return jnp.maximum(y, 0.0) if relu else y

    x = jnp.transpose(patches_nchw, (0, 2, 3, 1))
    w0, b0 = params['init']
    h = conv(x, w0, b0, 0, True)
    for (w, b) in params['main']:
        h = conv(h, w, b, 0, True)
    wf, bf = params['final']
    y = conv(h, wf, bf, 1, False)
    y = jnp.transpose(y, (0, 3, 1, 2))
    return y if est_type == 'direct' else patches_nchw - y


if __name__ == "__main__":
    num_layers = 2
    num_channels = 8
    filter_size = 3
    N, H, W = 2, 16, 16

    key = jax.random.PRNGKey(0)
    key, pkey = jax.random.split(key)
    params = init_params(key, num_layers, num_channels, filter_size)
    patches = jax.random.normal(pkey, (N, 1, H, W), jnp.float32)

    out = dncnn_forward(patches, params, est_type='direct')
    out = jax.block_until_ready(out)

    # sanity check vs pure-JAX reference
    ref = jax.block_until_ready(dncnn_forward_ref(patches, params))
    assert out.shape == ref.shape, (out.shape, ref.shape)
    assert jnp.allclose(out, ref, atol=1e-4, rtol=1e-4), "mismatch vs reference"

    print("KERNEL_OK")
</pallas_src>

<mosaic_0001>
module attributes {stable_mosaic.version = 11 : i64} {
  func.func @_fused_dncnn_kernel(%arg0: i32, %arg1: memref<1x8x256xf32, #tpu.memory_space<vmem>>, %arg2: memref<3x1x256xf32, #tpu.memory_space<vmem>>, %arg3: memref<8x72xf32, #tpu.memory_space<vmem>>, %arg4: memref<8x1xf32, #tpu.memory_space<vmem>>, %arg5: memref<8x72xf32, #tpu.memory_space<vmem>>, %arg6: memref<8x1xf32, #tpu.memory_space<vmem>>, %arg7: memref<8x72xf32, #tpu.memory_space<vmem>>, %arg8: memref<8x1xf32, #tpu.memory_space<vmem>>, %arg9: memref<1x72xf32, #tpu.memory_space<vmem>>, %arg10: memref<1x1xf32, #tpu.memory_space<vmem>>, %arg11: memref<1x1x256xf32, #tpu.memory_space<vmem>>, %arg12: memref<8x768xf32, #tpu.memory_space<vmem>>) attributes {dimension_semantics = [#tpu.dimension_semantics<parallel>], iteration_bounds = array<i64: 2>, scalar_prefetch = 0 : i64, scratch_operands = 1 : i64, tpu.core_type = #tpu.core_type<tc>, window_params = [{transform_indices = @transform_0, window_bounds = array<i64: 1, 8, 256>}, {pipeline_mode = #tpu.pipeline_mode<synchronous>, transform_indices = @transform_1, window_bounds = array<i64: 3, 1, 256>}, {pipeline_mode = #tpu.pipeline_mode<synchronous>, transform_indices = @transform_2, window_bounds = array<i64: 8, 72>}, {pipeline_mode = #tpu.pipeline_mode<synchronous>, transform_indices = @transform_3, window_bounds = array<i64: 8, 1>}, {pipeline_mode = #tpu.pipeline_mode<synchronous>, transform_indices = @transform_4, window_bounds = array<i64: 8, 72>}, {pipeline_mode = #tpu.pipeline_mode<synchronous>, transform_indices = @transform_5, window_bounds = array<i64: 8, 1>}, {pipeline_mode = #tpu.pipeline_mode<synchronous>, transform_indices = @transform_6, window_bounds = array<i64: 8, 72>}, {pipeline_mode = #tpu.pipeline_mode<synchronous>, transform_indices = @transform_7, window_bounds = array<i64: 8, 1>}, {pipeline_mode = #tpu.pipeline_mode<synchronous>, transform_indices = @transform_8, window_bounds = array<i64: 1, 72>}, {pipeline_mode = #tpu.pipeline_mode<synchronous>, transform_indices = @transform_9, window_bounds = array<i64: 1, 1>}, {transform_indices = @transform_10, window_bounds = array<i64: 1, 1, 256>}]} {
    %cst = arith.constant 0.000000e+00 : f32
    %0 = vector.broadcast %cst : f32 to vector<8x768xf32>
    %c0 = arith.constant 0 : index
    %c0_0 = arith.constant 0 : index
    %1 = vector.load %arg12[%c0, %c0_0] : memref<8x768xf32, #tpu.memory_space<vmem>>, vector<8x768xf32>
    tpu.vector_store %arg12[%c0, %c0_0], %0 {strides = array<i32>} : memref<8x768xf32, #tpu.memory_space<vmem>>, vector<8x768xf32>,
    %c0_1 = arith.constant 0 : index
    %c0_2 = arith.constant 0 : index
    %c0_3 = arith.constant 0 : index
    %2 = vector.load %arg1[%c0_1, %c0_2, %c0_3] : memref<1x8x256xf32, #tpu.memory_space<vmem>>, vector<1x8x256xf32>
    %3 = vector.shape_cast %2 : vector<1x8x256xf32> to vector<8x256xf32>
    %c0_4 = arith.constant 0 : index
    %c256 = arith.constant 256 : index
    %4 = vector.load %arg12[%c0_4, %c256] : memref<8x768xf32, #tpu.memory_space<vmem>>, vector<8x256xf32>
    tpu.vector_store %arg12[%c0_4, %c256], %3 {strides = array<i32>} : memref<8x768xf32, #tpu.memory_space<vmem>>, vector<8x256xf32>,
    %c0_5 = arith.constant 0 : index
    %c256_6 = arith.constant 256 : index
    %5 = vector.load %arg12[%c0_5, %c256_6] : memref<8x768xf32, #tpu.memory_space<vmem>>, vector<8x256xf32>
    %c0_7 = arith.constant 0 : index
    %c257 = arith.constant 257 : index
    %6 = vector.load %arg12[%c0_7, %c257] : memref<8x768xf32, #tpu.memory_space<vmem>>, vector<8x256xf32>
    %c0_8 = arith.constant 0 : index
    %c258 = arith.constant 258 : index
    %7 = vector.load %arg12[%c0_8, %c258] : memref<8x768xf32, #tpu.memory_space<vmem>>, vector<8x256xf32>
    %c0_9 = arith.constant 0 : index
    %c272 = arith.constant 272 : index
    %8 = vector.load %arg12[%c0_9, %c272] : memref<8x768xf32, #tpu.memory_space<vmem>>, vector<8x256xf32>
    %c0_10 = arith.constant 0 : index
    %c273 = arith.constant 273 : index
    %9 = vector.load %arg12[%c0_10, %c273] : memref<8x768xf32, #tpu.memory_space<vmem>>, vector<8x256xf32>
    %c0_11 = arith.constant 0 : index
    %c274 = arith.constant 274 : index
    %10 = vector.load %arg12[%c0_11, %c274] : memref<8x768xf32, #tpu.memory_space<vmem>>, vector<8x256xf32>
    %c0_12 = arith.constant 0 : index
    %c288 = arith.constant 288 : index
    %11 = vector.load %arg12[%c0_12, %c288] : memref<8x768xf32, #tpu.memory_space<vmem>>, vector<8x256xf32>
    %c0_13 = arith.constant 0 : index
    %c289 = arith.constant 289 : index
    %12 = vector.load %arg12[%c0_13, %c289] : memref<8x768xf32, #tpu.memory_space<vmem>>, vector<8x256xf32>
    %c0_14 = arith.constant 0 : index
    %c290 = arith.constant 290 : index
    %13 = vector.load %arg12[%c0_14, %c290] : memref<8x768xf32, #tpu.memory_space<vmem>>, vector<8x256xf32>
    %14 = tpu.concatenate %5, %6, %7, %8, %9, %10, %11, %12, %13 in 0 : vector<8x256xf32>, vector<8x256xf32>, vector<8x256xf32>, vector<8x256xf32>, vector<8x256xf32>, vector<8x256xf32>, vector<8x256xf32>, vector<8x256xf32>, vector<8x256xf32> -> vector<72x256xf32>
    %c0_15 = arith.constant 0 : index
    %c0_16 = arith.constant 0 : index
    %15 = vector.load %arg3[%c0_15, %c0_16] : memref<8x72xf32, #tpu.memory_space<vmem>>, vector<8x72xf32>
    %cst_17 = arith.constant dense<0.000000e+00> : vector<8x256xf32>
    %16 = tpu.matmul %15, %14, %cst_17 {dimension_numbers = #tpu.dot_dimension_numbers<[1], [0], [0], [1], [0, 0, 1, 1], [], []>} : vector<8x72xf32>, vector<72x256xf32>, vector<8x256xf32> -> vector<8x256xf32>
    %c0_18 = arith.constant 0 : index
    %c0_19 = arith.constant 0 : index
    %17 = vector.load %arg4[%c0_18, %c0_19] : memref<8x1xf32, #tpu.memory_space<vmem>>, vector<8x1xf32>
    %18 = vector.broadcast %17 : vector<8x1xf32> to vector<8x256xf32>
    %19 = arith.addf %16, %18 : vector<8x256xf32>
    %cst_20 = arith.constant 0.000000e+00 : f32
    %20 = vector.broadcast %cst_20 : f32 to vector<8x256xf32>
    %21 = arith.maximumf %19, %20 : vector<8x256xf32>
    %c0_21 = arith.constant 0 : index
    %c0_22 = arith.constant 0 : index
    %c0_23 = arith.constant 0 : index
    %22 = vector.load %arg2[%c0_21, %c0_22, %c0_23] : memref<3x1x256xf32, #tpu.memory_space<vmem>>, vector<1x1x256xf32>
    %23 = vector.shape_cast %22 : vector<1x1x256xf32> to vector<1x256xf32>
    %24 = vector.broadcast %23 : vector<1x256xf32> to vector<8x256xf32>
    %25 = arith.mulf %21, %24 : vector<8x256xf32>
    %c0_24 = arith.constant 0 : index
    %c256_25 = arith.constant 256 : index
    %26 = vector.load %arg12[%c0_24, %c256_25] : memref<8x768xf32, #tpu.memory_space<vmem>>, vector<8x256xf32>
    tpu.vector_store %arg12[%c0_24, %c256_25], %25 {strides = array<i32>} : memref<8x768xf32, #tpu.memory_space<vmem>>, vector<8x256xf32>,
    %c0_26 = arith.constant 0 : index
    %c256_27 = arith.constant 256 : index
    %27 = vector.load %arg12[%c0_26, %c256_27] : memref<8x768xf32, #tpu.memory_space<vmem>>, vector<8x256xf32>
    %c0_28 = arith.constant 0 : index
    %c257_29 = arith.constant 257 : index
    %28 = vector.load %arg12[%c0_28, %c257_29] : memref<8x768xf32, #tpu.memory_space<vmem>>, vector<8x256xf32>
    %c0_30 = arith.constant 0 : index
    %c258_31 = arith.constant 258 : index
    %29 = vector.load %arg12[%c0_30, %c258_31] : memref<8x768xf32, #tpu.memory_space<vmem>>, vector<8x256xf32>
    %c0_32 = arith.constant 0 : index
    %c272_33 = arith.constant 272 : index
    %30 = vector.load %arg12[%c0_32, %c272_33] : memref<8x768xf32, #tpu.memory_space<vmem>>, vector<8x256xf32>
    %c0_34 = arith.constant 0 : index
    %c273_35 = arith.constant 273 : index
    %31 = vector.load %arg12[%c0_34, %c273_35] : memref<8x768xf32, #tpu.memory_space<vmem>>, vector<8x256xf32>
    %c0_36 = arith.constant 0 : index
    %c274_37 = arith.constant 274 : index
    %32 = vector.load %arg12[%c0_36, %c274_37] : memref<8x768xf32, #tpu.memory_space<vmem>>, vector<8x256xf32>
    %c0_38 = arith.constant 0 : index
    %c288_39 = arith.constant 288 : index
    %33 = vector.load %arg12[%c0_38, %c288_39] : memref<8x768xf32, #tpu.memory_space<vmem>>, vector<8x256xf32>
    %c0_40 = arith.constant 0 : index
    %c289_41 = arith.constant 289 : index
    %34 = vector.load %arg12[%c0_40, %c289_41] : memref<8x768xf32, #tpu.memory_space<vmem>>, vector<8x256xf32>
    %c0_42 = arith.constant 0 : index
    %c290_43 = arith.constant 290 : index
    %35 = vector.load %arg12[%c0_42, %c290_43] : memref<8x768xf32, #tpu.memory_space<vmem>>, vector<8x256xf32>
    %36 = tpu.concatenate %27, %28, %29, %30, %31, %32, %33, %34, %35 in 0 : vector<8x256xf32>, vector<8x256xf32>, vector<8x256xf32>, vector<8x256xf32>, vector<8x256xf32>, vector<8x256xf32>, vector<8x256xf32>, vector<8x256xf32>, vector<8x256xf32> -> vector<72x256xf32>
    %c0_44 = arith.constant 0 : index
    %c0_45 = arith.constant 0 : index
    %37 = vector.load %arg5[%c0_44, %c0_45] : memref<8x72xf32, #tpu.memory_space<vmem>>, vector<8x72xf32>
    %cst_46 = arith.constant dense<0.000000e+00> : vector<8x256xf32>
    %38 = tpu.matmul %37, %36, %cst_46 {dimension_numbers = #tpu.dot_dimension_numbers<[1], [0], [0], [1], [0, 0, 1, 1], [], []>} : vector<8x72xf32>, vector<72x256xf32>, vector<8x256xf32> -> vector<8x256xf32>
    %c0_47 = arith.constant 0 : index
    %c0_48 = arith.constant 0 : index
    %39 = vector.load %arg6[%c0_47, %c0_48] : memref<8x1xf32, #tpu.memory_space<vmem>>, vector<8x1xf32>
    %40 = vector.broadcast %39 : vector<8x1xf32> to vector<8x256xf32>
    %41 = arith.addf %38, %40 : vector<8x256xf32>
    %cst_49 = arith.constant 0.000000e+00 : f32
    %42 = vector.broadcast %cst_49 : f32 to vector<8x256xf32>
    %43 = arith.maximumf %41, %42 : vector<8x256xf32>
    %c1 = arith.constant 1 : index
    %c0_50 = arith.constant 0 : index
    %c0_51 = arith.constant 0 : index
    %44 = vector.load %arg2[%c1, %c0_50, %c0_51] : memref<3x1x256xf32, #tpu.memory_space<vmem>>, vector<1x1x256xf32>
    %45 = vector.shape_cast %44 : vector<1x1x256xf32> to vector<1x256xf32>
    %46 = vector.broadcast %45 : vector<1x256xf32> to vector<8x256xf32>
    %47 = arith.mulf %43, %46 : vector<8x256xf32>
    %c0_52 = arith.constant 0 : index
    %c256_53 = arith.constant 256 : index
    %48 = vector.load %arg12[%c0_52, %c256_53] : memref<8x768xf32, #tpu.memory_space<vmem>>, vector<8x256xf32>
    tpu.vector_store %arg12[%c0_52, %c256_53], %47 {strides = array<i32>} : memref<8x768xf32, #tpu.memory_space<vmem>>, vector<8x256xf32>,
    %c0_54 = arith.constant 0 : index
    %c256_55 = arith.constant 256 : index
    %49 = vector.load %arg12[%c0_54, %c256_55] : memref<8x768xf32, #tpu.memory_space<vmem>>, vector<8x256xf32>
    %c0_56 = arith.constant 0 : index
    %c257_57 = arith.constant 257 : index
    %50 = vector.load %arg12[%c0_56, %c257_57] : memref<8x768xf32, #tpu.memory_space<vmem>>, vector<8x256xf32>
    %c0_58 = arith.constant 0 : index
    %c258_59 = arith.constant 258 : index
    %51 = vector.load %arg12[%c0_58, %c258_59] : memref<8x768xf32, #tpu.memory_space<vmem>>, vector<8x256xf32>
    %c0_60 = arith.constant 0 : index
    %c272_61 = arith.constant 272 : index
    %52 = vector.load %arg12[%c0_60, %c272_61] : memref<8x768xf32, #tpu.memory_space<vmem>>, vector<8x256xf32>
    %c0_62 = arith.constant 0 : index
    %c273_63 = arith.constant 273 : index
    %53 = vector.load %arg12[%c0_62, %c273_63] : memref<8x768xf32, #tpu.memory_space<vmem>>, vector<8x256xf32>
    %c0_64 = arith.constant 0 : index
    %c274_65 = arith.constant 274 : index
    %54 = vector.load %arg12[%c0_64, %c274_65] : memref<8x768xf32, #tpu.memory_space<vmem>>, vector<8x256xf32>
    %c0_66 = arith.constant 0 : index
    %c288_67 = arith.constant 288 : index
    %55 = vector.load %arg12[%c0_66, %c288_67] : memref<8x768xf32, #tpu.memory_space<vmem>>, vector<8x256xf32>
    %c0_68 = arith.constant 0 : index
    %c289_69 = arith.constant 289 : index
    %56 = vector.load %arg12[%c0_68, %c289_69] : memref<8x768xf32, #tpu.memory_space<vmem>>, vector<8x256xf32>
    %c0_70 = arith.constant 0 : index
    %c290_71 = arith.constant 290 : index
    %57 = vector.load %arg12[%c0_70, %c290_71] : memref<8x768xf32, #tpu.memory_space<vmem>>, vector<8x256xf32>
    %58 = tpu.concatenate %49, %50, %51, %52, %53, %54, %55, %56, %57 in 0 : vector<8x256xf32>, vector<8x256xf32>, vector<8x256xf32>, vector<8x256xf32>, vector<8x256xf32>, vector<8x256xf32>, vector<8x256xf32>, vector<8x256xf32>, vector<8x256xf32> -> vector<72x256xf32>
    %c0_72 = arith.constant 0 : index
    %c0_73 = arith.constant 0 : index
    %59 = vector.load %arg7[%c0_72, %c0_73] : memref<8x72xf32, #tpu.memory_space<vmem>>, vector<8x72xf32>
    %cst_74 = arith.constant dense<0.000000e+00> : vector<8x256xf32>
    %60 = tpu.matmul %59, %58, %cst_74 {dimension_numbers = #tpu.dot_dimension_numbers<[1], [0], [0], [1], [0, 0, 1, 1], [], []>} : vector<8x72xf32>, vector<72x256xf32>, vector<8x256xf32> -> vector<8x256xf32>
    %c0_75 = arith.constant 0 : index
    %c0_76 = arith.constant 0 : index
    %61 = vector.load %arg8[%c0_75, %c0_76] : memref<8x1xf32, #tpu.memory_space<vmem>>, vector<8x1xf32>
    %62 = vector.broadcast %61 : vector<8x1xf32> to vector<8x256xf32>
    %63 = arith.addf %60, %62 : vector<8x256xf32>
    %cst_77 = arith.constant 0.000000e+00 : f32
    %64 = vector.broadcast %cst_77 : f32 to vector<8x256xf32>
    %65 = arith.maximumf %63, %64 : vector<8x256xf32>
    %c2 = arith.constant 2 : index
    %c0_78 = arith.constant 0 : index
    %c0_79 = arith.constant 0 : index
    %66 = vector.load %arg2[%c2, %c0_78, %c0_79] : memref<3x1x256xf32, #tpu.memory_space<vmem>>, vector<1x1x256xf32>
    %67 = vector.shape_cast %66 : vector<1x1x256xf32> to vector<1x256xf32>
    %68 = vector.broadcast %67 : vector<1x256xf32> to vector<8x256xf32>
    %69 = arith.mulf %65, %68 : vector<8x256xf32>
    %c0_80 = arith.constant 0 : index
    %c256_81 = arith.constant 256 : index
    %70 = vector.load %arg12[%c0_80, %c256_81] : memref<8x768xf32, #tpu.memory_space<vmem>>, vector<8x256xf32>
    tpu.vector_store %arg12[%c0_80, %c256_81], %69 {strides = array<i32>} : memref<8x768xf32, #tpu.memory_space<vmem>>, vector<8x256xf32>,
    %c0_82 = arith.constant 0 : index
    %c239 = arith.constant 239 : index
    %71 = vector.load %arg12[%c0_82, %c239] : memref<8x768xf32, #tpu.memory_space<vmem>>, vector<8x256xf32>
    %c0_83 = arith.constant 0 : index
    %c240 = arith.constant 240 : index
    %72 = vector.load %arg12[%c0_83, %c240] : memref<8x768xf32, #tpu.memory_space<vmem>>, vector<8x256xf32>
    %c0_84 = arith.constant 0 : index
    %c241 = arith.constant 241 : index
    %73 = vector.load %arg12[%c0_84, %c241] : memref<8x768xf32, #tpu.memory_space<vmem>>, vector<8x256xf32>
    %c0_85 = arith.constant 0 : index
    %c255 = arith.constant 255 : index
    %74 = vector.load %arg12[%c0_85, %c255] : memref<8x768xf32, #tpu.memory_space<vmem>>, vector<8x256xf32>
    %c0_86 = arith.constant 0 : index
    %c256_87 = arith.constant 256 : index
    %75 = vector.load %arg12[%c0_86, %c256_87] : memref<8x768xf32, #tpu.memory_space<vmem>>, vector<8x256xf32>
    %c0_88 = arith.constant 0 : index
    %c257_89 = arith.constant 257 : index
    %76 = vector.load %arg12[%c0_88, %c257_89] : memref<8x768xf32, #tpu.memory_space<vmem>>, vector<8x256xf32>
    %c0_90 = arith.constant 0 : index
    %c271 = arith.constant 271 : index
    %77 = vector.load %arg12[%c0_90, %c271] : memref<8x768xf32, #tpu.memory_space<vmem>>, vector<8x256xf32>
    %c0_91 = arith.constant 0 : index
    %c272_92 = arith.constant 272 : index
    %78 = vector.load %arg12[%c0_91, %c272_92] : memref<8x768xf32, #tpu.memory_space<vmem>>, vector<8x256xf32>
    %c0_93 = arith.constant 0 : index
    %c273_94 = arith.constant 273 : index
    %79 = vector.load %arg12[%c0_93, %c273_94] : memref<8x768xf32, #tpu.memory_space<vmem>>, vector<8x256xf32>
    %80 = tpu.concatenate %71, %72, %73, %74, %75, %76, %77, %78, %79 in 0 : vector<8x256xf32>, vector<8x256xf32>, vector<8x256xf32>, vector<8x256xf32>, vector<8x256xf32>, vector<8x256xf32>, vector<8x256xf32>, vector<8x256xf32>, vector<8x256xf32> -> vector<72x256xf32>
    %c0_95 = arith.constant 0 : index
    %c0_96 = arith.constant 0 : index
    %81 = vector.load %arg9[%c0_95, %c0_96] : memref<1x72xf32, #tpu.memory_space<vmem>>, vector<1x72xf32>
    %cst_97 = arith.constant dense<0.000000e+00> : vector<1x256xf32>
    %82 = tpu.matmul %81, %80, %cst_97 {dimension_numbers = #tpu.dot_dimension_numbers<[1], [0], [0], [1], [0, 0, 1, 1], [], []>} : vector<1x72xf32>, vector<72x256xf32>, vector<1x256xf32> -> vector<1x256xf32>
    %c0_98 = arith.constant 0 : index
    %c0_99 = arith.constant 0 : index
    %83 = vector.load %arg10[%c0_98, %c0_99] : memref<1x1xf32, #tpu.memory_space<vmem>>, vector<1x1xf32>
    %84 = vector.broadcast %83 : vector<1x1xf32> to vector<1x256xf32>
    %85 = arith.addf %82, %84 : vector<1x256xf32>
    %c0_100 = arith.constant 0 : index
    %c0_101 = arith.constant 0 : index
    %c0_102 = arith.constant 0 : index
    %86 = vector.load %arg11[%c0_100, %c0_101, %c0_102] : memref<1x1x256xf32, #tpu.memory_space<vmem>>, vector<1x1x256xf32>
    %87 = vector.shape_cast %86 : vector<1x1x256xf32> to vector<1x256xf32>
    %88 = vector.shape_cast %85 : vector<1x256xf32> to vector<1x1x256xf32>
    tpu.vector_store %arg11[%c0_100, %c0_101, %c0_102], %88 {strides = array<i32>} : memref<1x1x256xf32, #tpu.memory_space<vmem>>, vector<1x1x256xf32>,
    return
  }
  func.func @transform_0(%arg0: i32) -> (i32, i32, i32) {
    %c0_i32 = arith.constant 0 : i32
    %c0_i32_0 = arith.constant 0 : i32
    %c0_i32_1 = arith.constant 0 : i32
    return %arg0, %c0_i32, %c0_i32_0 : i32, i32, i32
  }
  func.func @transform_1(%arg0: i32) -> (i32, i32, i32) {
    %c0_i32 = arith.constant 0 : i32
    %c0_i32_0 = arith.constant 0 : i32
    %c0_i32_1 = arith.constant 0 : i32
    %c0_i32_2 = arith.constant 0 : i32
    return %c0_i32, %c0_i32_0, %c0_i32_1 : i32, i32, i32
  }
  func.func @transform_2(%arg0: i32) -> (i32, i32) {
    %c0_i32 = arith.constant 0 : i32
    %c0_i32_0 = arith.constant 0 : i32
    %c0_i32_1 = arith.constant 0 : i32
    return %c0_i32, %c0_i32_0 : i32, i32
  }
  func.func @transform_3(%arg0: i32) -> (i32, i32) {
    %c0_i32 = arith.constant 0 : i32
    %c0_i32_0 = arith.constant 0 : i32
    %c0_i32_1 = arith.constant 0 : i32
    return %c0_i32, %c0_i32_0 : i32, i32
  }
  func.func @transform_4(%arg0: i32) -> (i32, i32) {
    %c0_i32 = arith.constant 0 : i32
    %c0_i32_0 = arith.constant 0 : i32
    %c0_i32_1 = arith.constant 0 : i32
    return %c0_i32, %c0_i32_0 : i32, i32
  }
  func.func @transform_5(%arg0: i32) -> (i32, i32) {
    %c0_i32 = arith.constant 0 : i32
    %c0_i32_0 = arith.constant 0 : i32
    %c0_i32_1 = arith.constant 0 : i32
    return %c0_i32, %c0_i32_0 : i32, i32
  }
  func.func @transform_6(%arg0: i32) -> (i32, i32) {
    %c0_i32 = arith.constant 0 : i32
    %c0_i32_0 = arith.constant 0 : i32
    %c0_i32_1 = arith.constant 0 : i32
    return %c0_i32, %c0_i32_0 : i32, i32
  }
  func.func @transform_7(%arg0: i32) -> (i32, i32) {
    %c0_i32 = arith.constant 0 : i32
    %c0_i32_0 = arith.constant 0 : i32
    %c0_i32_1 = arith.constant 0 : i32
    return %c0_i32, %c0_i32_0 : i32, i32
  }
  func.func @transform_8(%arg0: i32) -> (i32, i32) {
    %c0_i32 = arith.constant 0 : i32
    %c0_i32_0 = arith.constant 0 : i32
    %c0_i32_1 = arith.constant 0 : i32
    return %c0_i32, %c0_i32_0 : i32, i32
  }
  func.func @transform_9(%arg0: i32) -> (i32, i32) {
    %c0_i32 = arith.constant 0 : i32
    %c0_i32_0 = arith.constant 0 : i32
    %c0_i32_1 = arith.constant 0 : i32
    return %c0_i32, %c0_i32_0 : i32, i32
  }
  func.func @transform_10(%arg0: i32) -> (i32, i32, i32) {
    %c0_i32 = arith.constant 0 : i32
    %c0_i32_0 = arith.constant 0 : i32
    %c0_i32_1 = arith.constant 0 : i32
    return %arg0, %c0_i32, %c0_i32_0 : i32, i32, i32
  }
}

</mosaic_0001>

<llo_original>
// kernel: tpu_custom_call.1
$region0: #{tpu_custom_call.1}
  #allocation0 [shape = 'u32[]', space=smem, size = 0x4, offset = 0x4, fixed_abs, tag = 'smem constant byte address 0x4 - core index']
  #allocation1 [shape = 'u32[144,128]{1,0:T(1,128)}', space=vmem, size = 0x12000, scoped, tag = 'internal scratch']
  #allocation2 [shape = 'f32[8,768]{1,0:T(8,128)}', space=vmem, size = 0x6000, scoped, tag = 'scratch operand']
  #allocation3 [shape = 'f32[1,1]{1,0:T(1,128)S(1)}', space=vmem, size = 0x200, scoped, tag = 'scoped memory for tpu_custom_call.1']
  %s0 = inlined_call_operand.hbm [shape: f32[2,8,256], index: 0, kind: input, shape index: {}]
  %s1 = inlined_call_operand.vmem [shape: f32[3,1,256], index: 1, kind: input, shape index: {}]
  %s2 = inlined_call_operand.vmem [shape: f32[8,72], index: 2, kind: input, shape index: {}]
  %s3 = inlined_call_operand.vmem [shape: f32[8,1], index: 3, kind: input, shape index: {}]
  %s4 = inlined_call_operand.vmem [shape: f32[8,72], index: 4, kind: input, shape index: {}]
  %s5 = inlined_call_operand.vmem [shape: f32[8,1], index: 5, kind: input, shape index: {}]
  %s6 = inlined_call_operand.vmem [shape: f32[8,72], index: 6, kind: input, shape index: {}]
  %s7 = inlined_call_operand.vmem [shape: f32[8,1], index: 7, kind: input, shape index: {}]
  %s8 = inlined_call_operand.vmem [shape: f32[1,72], index: 8, kind: input, shape index: {}]
  %s9 = inlined_call_operand.<no memory space> [shape: f32[1,1], index: 9, kind: input, shape index: {}]
  %s10 = inlined_call_operand.hbm [shape: f32[2,1,256], index: 10, kind: output, shape index: {}]
  %s11 = sld [smem:[#allocation0]]
  $region77: #{tpu_custom_call.1} parent=0
    _
  %s13 = ssub.s32 1, %s11
  %s14 = scalar_select 0, %s13, %s11
  %v15 = vstv %s9
  %16 = vst [vmem:[#allocation3] sm:$0x1] %v15
  $region1: #{tpu_custom_call.1} parent=0
    #allocation4 [shape = 'u8[16384]{0}', space=vmem, size = 0x4000, scoped, tag = 'input window, operand 0']
    #allocation5 [shape = 's32[2]{0}', space=sflag, size = 0x8, scoped, tag = 'scoped memory for tpu_custom_call.1']
    #allocation6 [shape = 's32[2]{0}', space=sflag, size = 0x8, scoped, tag = 'scoped memory for tpu_custom_call.1']
    #allocation7 [shape = 'u8[2048]{0}', space=vmem, size = 0x800, scoped, tag = 'output window, operand 0']
    %17 = vsyncpa [#allocation5], 0
    %s18 = scalar_lea.sflag [#allocation5], 1
    %19 = vsyncpa %s18, 0
    %20 = vsyncpa [#allocation6], 0
    %s21 = scalar_lea.sflag [#allocation6], 1
    %22 = vsyncpa %s21, 0
    loop: start=0, step=1, limit=4
    $region2: #{tpu_custom_call.1} parent=1 // loop_pre_header
      _
    $region3: #{tpu_custom_call.1} parent=1 // loop_header
      %s24 = sphi 0, %s28
      %p25 = scmp.ge.s32.totalorder %s24, 4
      %s34 = sphi 0, %s36
      %s37 = sphi 0, %s34
      %s38 = sphi 0, %s37
      %s54 = sphi 0, %s38
      %s58 = sphi 0, %s58
      %s60 = sphi 0, %s58
      %s61 = sphi 0, %s60
      %s75 = sphi 0, %s61
      %s79 = sphi 0, %s79
      %s81 = sphi 0, %s79
      %s82 = sphi 0, %s81
      %s96 = sphi 0, %s82
      %s100 = sphi 0, %s100
      %s102 = sphi 0, %s100
      %s103 = sphi 0, %s102
      %s117 = sphi 0, %s103
      %s121 = sphi 0, %s121
      %s123 = sphi 0, %s121
      %s124 = sphi 0, %s123
      %s138 = sphi 0, %s124
      %s142 = sphi 0, %s142
      %s144 = sphi 0, %s142
      %s145 = sphi 0, %s144
      %s159 = sphi 0, %s145
      %s163 = sphi 0, %s163
      %s165 = sphi 0, %s163
      %s166 = sphi 0, %s165
      %s180 = sphi 0, %s166
      %s184 = sphi 0, %s184
      %s186 = sphi 0, %s184
      %s187 = sphi 0, %s186
      %s201 = sphi 0, %s187
      %s205 = sphi 0, %s205
      %s207 = sphi 0, %s205
      %s208 = sphi 0, %s207
      %s222 = sphi 0, %s208
      %s226 = sphi 0, %s226
      %s228 = sphi 0, %s226
      %s229 = sphi 0, %s228
      %s243 = sphi 0, %s229
      %s249 = sphi 0, %s251
      %s252 = sphi 0, %s249
      %s253 = sphi 0, %s252
      %s269 = sphi 0, %s253
    $region4: #{tpu_custom_call.1} parent=1 // loop_header_branch
      %27 = sbr.rel (%p25) target = $region8
    $region5: #{tpu_custom_call.1} parent=1 // loop_body
      %s29 = ssub.s32 %s24, 1
      %s30 = ssub.s32 %s24, 2
      %s31 = sadd.s32 %s24, 1
      %s32 = ssub.s32 %s24, %s31
      %p33 = scmp.eq.s32.totalorder %s32, 0
      %s35 = sadd.s32 %s34, 1
      %s36 = scalar_select %p33, %s34, %s35
      %p39 = pneg %p33
      %p40 = scmp.eq.s32.totalorder %s24, 1
      %p41 = por %p39, %p40
      %p42 = scmp.ne.s32.totalorder %s34, %s37
      %p43 = scmp.eq.s32.totalorder %s24, 0
      %p44 = por %p42, %p43
      %p45 = scmp.ne.s32.totalorder %s34, %s37
      %p46 = scmp.eq.s32.totalorder %s29, 1
      %p47 = por %p45, %p46
      %p48 = scmp.ne.s32.totalorder %s37, %s38
      %p49 = scmp.eq.s32.totalorder %s29, 0
      %p50 = por %p48, %p49
      %p51 = scmp.ne.s32.totalorder %s37, %s38
      %p52 = scmp.eq.s32.totalorder %s30, 1
      %p53 = por %p51, %p52
      %p55 = scmp.ne.s32.totalorder %s38, %s54
      %p56 = scmp.eq.s32.totalorder %s30, 0
      %p57 = por %p55, %p56
      %s59 = sadd.s32 %s58, 1
      %p62 = scmp.eq.s32.totalorder %s24, 1
      %p63 = scmp.ne.s32.totalorder %s58, %s60
      %p64 = scmp.eq.s32.totalorder %s24, 0
      %p65 = por %p63, %p64
      %p66 = scmp.ne.s32.totalorder %s58, %s60
      %p67 = scmp.eq.s32.totalorder %s29, 1
      %p68 = por %p66, %p67
      %p69 = scmp.ne.s32.totalorder %s60, %s61
      %p70 = scmp.eq.s32.totalorder %s29, 0
      %p71 = por %p69, %p70
      %p72 = scmp.ne.s32.totalorder %s60, %s61
      %p73 = scmp.eq.s32.totalorder %s30, 1
      %p74 = por %p72, %p73
      %p76 = scmp.ne.s32.totalorder %s61, %s75
      %p77 = scmp.eq.s32.totalorder %s30, 0
      %p78 = por %p76, %p77
      %s80 = sadd.s32 %s79, 1
      %p83 = scmp.eq.s32.totalorder %s24, 1
      %p84 = scmp.ne.s32.totalorder %s79, %s81
      %p85 = scmp.eq.s32.totalorder %s24, 0
      %p86 = por %p84, %p85
      %p87 = scmp.ne.s32.totalorder %s79, %s81
      %p88 = scmp.eq.s32.totalorder %s29, 1
      %p89 = por %p87, %p88
      %p90 = scmp.ne.s32.totalorder %s81, %s82
      %p91 = scmp.eq.s32.totalorder %s29, 0
      %p92 = por %p90, %p91
      %p93 = scmp.ne.s32.totalorder %s81, %s82
      %p94 = scmp.eq.s32.totalorder %s30, 1
      %p95 = por %p93, %p94
      %p97 = scmp.ne.s32.totalorder %s82, %s96
      %p98 = scmp.eq.s32.totalorder %s30, 0
      %p99 = por %p97, %p98
      %s101 = sadd.s32 %s100, 1
      %p104 = scmp.eq.s32.totalorder %s24, 1
      %p105 = scmp.ne.s32.totalorder %s100, %s102
      %p106 = scmp.eq.s32.totalorder %s24, 0
      %p107 = por %p105, %p106
      %p108 = scmp.ne.s32.totalorder %s100, %s102
      %p109 = scmp.eq.s32.totalorder %s29, 1
      %p110 = por %p108, %p109
      %p111 = scmp.ne.s32.totalorder %s102, %s103
      %p112 = scmp.eq.s32.totalorder %s29, 0
      %p113 = por %p111, %p112
      %p114 = scmp.ne.s32.totalorder %s102, %s103
      %p115 = scmp.eq.s32.totalorder %s30, 1
      %p116 = por %p114, %p115
      %p118 = scmp.ne.s32.totalorder %s103, %s117
      %p119 = scmp.eq.s32.totalorder %s30, 0
      %p120 = por %p118, %p119
      %s122 = sadd.s32 %s121, 1
      %p125 = scmp.eq.s32.totalorder %s24, 1
      %p126 = scmp.ne.s32.totalorder %s121, %s123
      %p127 = scmp.eq.s32.totalorder %s24, 0
      %p128 = por %p126, %p127
      %p129 = scmp.ne.s32.totalorder %s121, %s123
      %p130 = scmp.eq.s32.totalorder %s29, 1
      %p131 = por %p129, %p130
      %p132 = scmp.ne.s32.totalorder %s123, %s124
      %p133 = scmp.eq.s32.totalorder %s29, 0
      %p134 = por %p132, %p133
      %p135 = scmp.ne.s32.totalorder %s123, %s124
      %p136 = scmp.eq.s32.totalorder %s30, 1
      %p137 = por %p135, %p136
      %p139 = scmp.ne.s32.totalorder %s124, %s138
      %p140 = scmp.eq.s32.totalorder %s30, 0
      %p141 = por %p139, %p140
      %s143 = sadd.s32 %s142, 1
      %p146 = scmp.eq.s32.totalorder %s24, 1
      %p147 = scmp.ne.s32.totalorder %s142, %s144
      %p148 = scmp.eq.s32.totalorder %s24, 0
      %p149 = por %p147, %p148
      %p150 = scmp.ne.s32.totalorder %s142, %s144
      %p151 = scmp.eq.s32.totalorder %s29, 1
      %p152 = por %p150, %p151
      %p153 = scmp.ne.s32.totalorder %s144, %s145
      %p154 = scmp.eq.s32.totalorder %s29, 0
      %p155 = por %p153, %p154
      %p156 = scmp.ne.s32.totalorder %s144, %s145
      %p157 = scmp.eq.s32.totalorder %s30, 1
      %p158 = por %p156, %p157
      %p160 = scmp.ne.s32.totalorder %s145, %s159
      %p161 = scmp.eq.s32.totalorder %s30, 0
      %p162 = por %p160, %p161
      %s164 = sadd.s32 %s163, 1
      %p167 = scmp.eq.s32.totalorder %s24, 1
      %p168 = scmp.ne.s32.totalorder %s163, %s165
      %p169 = scmp.eq.s32.totalorder %s24, 0
      %p170 = por %p168, %p169
      %p171 = scmp.ne.s32.totalorder %s163, %s165
      %p172 = scmp.eq.s32.totalorder %s29, 1
      %p173 = por %p171, %p172
      %p174 = scmp.ne.s32.totalorder %s165, %s166
      %p175 = scmp.eq.s32.totalorder %s29, 0
      %p176 = por %p174, %p175
      %p177 = scmp.ne.s32.totalorder %s165, %s166
      %p178 = scmp.eq.s32.totalorder %s30, 1
      %p179 = por %p177, %p178
      %p181 = scmp.ne.s32.totalorder %s166, %s180
      %p182 = scmp.eq.s32.totalorder %s30, 0
      %p183 = por %p181, %p182
      %s185 = sadd.s32 %s184, 1
      %p188 = scmp.eq.s32.totalorder %s24, 1
      %p189 = scmp.ne.s32.totalorder %s184, %s186
      %p190 = scmp.eq.s32.totalorder %s24, 0
      %p191 = por %p189, %p190
      %p192 = scmp.ne.s32.totalorder %s184, %s186
      %p193 = scmp.eq.s32.totalorder %s29, 1
      %p194 = por %p192, %p193
      %p195 = scmp.ne.s32.totalorder %s186, %s187
      %p196 = scmp.eq.s32.totalorder %s29, 0
      %p197 = por %p195, %p196
      %p198 = scmp.ne.s32.totalorder %s186, %s187
      %p199 = scmp.eq.s32.totalorder %s30, 1
      %p200 = por %p198, %p199
      %p202 = scmp.ne.s32.totalorder %s187, %s201
      %p203 = scmp.eq.s32.totalorder %s30, 0
      %p204 = por %p202, %p203
      %s206 = sadd.s32 %s205, 1
      %p209 = scmp.eq.s32.totalorder %s24, 1
      %p210 = scmp.ne.s32.totalorder %s205, %s207
      %p211 = scmp.eq.s32.totalorder %s24, 0
      %p212 = por %p210, %p211
      %p213 = scmp.ne.s32.totalorder %s205, %s207
      %p214 = scmp.eq.s32.totalorder %s29, 1
      %p215 = por %p213, %p214
      %p216 = scmp.ne.s32.totalorder %s207, %s208
      %p217 = scmp.eq.s32.totalorder %s29, 0
      %p218 = por %p216, %p217
      %p219 = scmp.ne.s32.totalorder %s207, %s208
      %p220 = scmp.eq.s32.totalorder %s30, 1
      %p221 = por %p219, %p220
      %p223 = scmp.ne.s32.totalorder %s208, %s222
      %p224 = scmp.eq.s32.totalorder %s30, 0
      %p225 = por %p223, %p224
      %s227 = sadd.s32 %s226, 1
      %p230 = scmp.eq.s32.totalorder %s24, 1
      %p231 = scmp.ne.s32.totalorder %s226, %s228
      %p232 = scmp.eq.s32.totalorder %s24, 0
      %p233 = por %p231, %p232
      %p234 = scmp.ne.s32.totalorder %s226, %s228
      %p235 = scmp.eq.s32.totalorder %s29, 1
      %p236 = por %p234, %p235
      %p237 = scmp.ne.s32.totalorder %s228, %s229
      %p238 = scmp.eq.s32.totalorder %s29, 0
      %p239 = por %p237, %p238
      %p240 = scmp.ne.s32.totalorder %s228, %s229
      %p241 = scmp.eq.s32.totalorder %s30, 1
      %p242 = por %p240, %p241
      %p244 = scmp.ne.s32.totalorder %s229, %s243
      %p245 = scmp.eq.s32.totalorder %s30, 0
      %p246 = por %p244, %p245
      %s247 = ssub.s32 %s24, %s31
      %p248 = scmp.eq.s32.totalorder %s247, 0
      %s250 = sadd.s32 %s249, 1
      %s251 = scalar_select %p248, %s249, %s250
      %p254 = pneg %p248
      %p255 = scmp.eq.s32.totalorder %s24, 1
      %p256 = por %p254, %p255
      %p257 = scmp.ne.s32.totalorder %s249, %s252
      %p258 = scmp.eq.s32.totalorder %s24, 0
      %p259 = por %p257, %p258
      %p260 = scmp.ne.s32.totalorder %s249, %s252
      %p261 = scmp.eq.s32.totalorder %s29, 1
      %p262 = por %p260, %p261
      %p263 = scmp.ne.s32.totalorder %s252, %s253
      %p264 = scmp.eq.s32.totalorder %s29, 0
      %p265 = por %p263, %p264
      %p266 = scmp.ne.s32.totalorder %s252, %s253
      %p267 = scmp.eq.s32.totalorder %s30, 1
      %p268 = por %p266, %p267
      %p270 = scmp.ne.s32.totalorder %s253, %s269
      %p271 = scmp.eq.s32.totalorder %s30, 0
      %p272 = por %p270, %p271
      %p273 = scmp.le.s32.totalorder 1, %s24
      %p274 = scmp.lt.s32.totalorder %s24, 3
      %p275 = pnand %p273, %p274
      %p276 = pneg %p275
      // Predicated region
      $region9: #{tpu_custom_call.1} parent=5 // pred_check
        _
      $region10: #{tpu_custom_call.1} parent=5 // pred_check_branch
        %278 = sbr.rel (%p275) target = $region12
      $region11: #{tpu_custom_call.1} parent=5 // pred_region
        %s279 = ssub.s32 %s24, 1
        // Predicated region
        $region13: #{tpu_custom_call.1} parent=11 // pred_check
          %p280 = pneg %p71
        $region14: #{tpu_custom_call.1} parent=11 // pred_check_branch
          %282 = sbr.rel (%p280) target = $region16
        $region15: #{tpu_custom_call.1} parent=11 // pred_region
          _
        $region16: #{tpu_custom_call.1} parent=11 // pred_fallthru
          _
        // Predicated region
        $region17: #{tpu_custom_call.1} parent=11 // pred_check
          %p283 = pneg %p92
        $region18: #{tpu_custom_call.1} parent=11 // pred_check_branch
          %285 = sbr.rel (%p283) target = $region20
        $region19: #{tpu_custom_call.1} parent=11 // pred_region
          _
        $region20: #{tpu_custom_call.1} parent=11 // pred_fallthru
          _
        // Predicated region
        $region21: #{tpu_custom_call.1} parent=11 // pred_check
          %p286 = pneg %p113
        $region22: #{tpu_custom_call.1} parent=11 // pred_check_branch
          %288 = sbr.rel (%p286) target = $region24
        $region23: #{tpu_custom_call.1} parent=11 // pred_region
          _
        $region24: #{tpu_custom_call.1} parent=11 // pred_fallthru
          _
        // Predicated region
        $region25: #{tpu_custom_call.1} parent=11 // pred_check
          %p289 = pneg %p134
        $region26: #{tpu_custom_call.1} parent=11 // pred_check_branch
          %291 = sbr.rel (%p289) target = $region28
        $region27: #{tpu_custom_call.1} parent=11 // pred_region
          _
        $region28: #{tpu_custom_call.1} parent=11 // pred_fallthru
          _
        // Predicated region
        $region29: #{tpu_custom_call.1} parent=11 // pred_check
          %p292 = pneg %p155
        $region30: #{tpu_custom_call.1} parent=11 // pred_check_branch
          %294 = sbr.rel (%p292) target = $region32
        $region31: #{tpu_custom_call.1} parent=11 // pred_region
          _
        $region32: #{tpu_custom_call.1} parent=11 // pred_fallthru
          _
        // Predicated region
        $region33: #{tpu_custom_call.1} parent=11 // pred_check
          %p295 = pneg %p176
        $region34: #{tpu_custom_call.1} parent=11 // pred_check_branch
          %297 = sbr.rel (%p295) target = $region36
        $region35: #{tpu_custom_call.1} parent=11 // pred_region
          _
        $region36: #{tpu_custom_call.1} parent=11 // pred_fallthru
          _
        // Predicated region
        $region37: #{tpu_custom_call.1} parent=11 // pred_check
          %p298 = pneg %p197
        $region38: #{tpu_custom_call.1} parent=11 // pred_check_branch
          %300 = sbr.rel (%p298) target = $region40
        $region39: #{tpu_custom_call.1} parent=11 // pred_region
          _
        $region40: #{tpu_custom_call.1} parent=11 // pred_fallthru
          _
        // Predicated region
        $region41: #{tpu_custom_call.1} parent=11 // pred_check
          %p301 = pneg %p218
        $region42: #{tpu_custom_call.1} parent=11 // pred_check_branch
          %303 = sbr.rel (%p301) target = $region44
        $region43: #{tpu_custom_call.1} parent=11 // pred_region
          _
        $region44: #{tpu_custom_call.1} parent=11 // pred_fallthru
          _
        // Predicated region
        $region45: #{tpu_custom_call.1} parent=11 // pred_check
          %p304 = pneg %p239
        $region46: #{tpu_custom_call.1} parent=11 // pred_check_branch
          %306 = sbr.rel (%p304) target = $region48
        $region47: #{tpu_custom_call.1} parent=11 // pred_region
          _
        $region48: #{tpu_custom_call.1} parent=11 // pred_fallthru
          _
      $region12: #{tpu_custom_call.1} parent=5 // pred_fallthru
        _
      %p307 = scmp.lt.s32.totalorder %s24, 2
      // Predicated region
      $region49: #{tpu_custom_call.1} parent=5 // pred_check
        %p308 = pneg %p307
      $region50: #{tpu_custom_call.1} parent=5 // pred_check_branch
        %310 = sbr.rel (%p308) target = $region52
      $region51: #{tpu_custom_call.1} parent=5 // pred_region
        // Predicated region
        $region53: #{tpu_custom_call.1} parent=51 // pred_check
          %p311 = pneg %p44
        $region54: #{tpu_custom_call.1} parent=51 // pred_check_branch
          %313 = sbr.rel (%p311) target = $region56
        $region55: #{tpu_custom_call.1} parent=51 // pred_region
          %s314 = sand.u32 %s34, 1
          %s315 = scalar_lea.sflag [#allocation5], %s314
          %s316 = sand.u32 %s34, 1
          %s317 = smul.addr %s316, 16
          %s318 = scalar_lea.vmem [#allocation4], %s317
          %s320 = ssub.s32 256, 256
          %321 = vsyncadd %s315, %s320
          %s322 = smul.addr %s24, 2
          %s323 = smul.addr %s322, 128
          %s324 = scalar_lea.hbm %s0, %s323
          %s326 = sshll.u32 %s318, 4
          %s327 = int_to_ptr.vmem [resolvable:$true] %s326
          %329 = dma.hbm_to_vmem [thread:$0]  %s324, 256, %s327, %s315
        $region56: #{tpu_custom_call.1} parent=51 // pred_fallthru
          _
      $region52: #{tpu_custom_call.1} parent=5 // pred_fallthru
        _
      %p330 = scmp.le.s32.totalorder 1, %s24
      %p331 = scmp.lt.s32.totalorder %s24, 3
      %p332 = pnand %p330, %p331
      %p333 = pneg %p332
      // Predicated region
      $region57: #{tpu_custom_call.1} parent=5 // pred_check
        _
      $region58: #{tpu_custom_call.1} parent=5 // pred_check_branch
        %335 = sbr.rel (%p332) target = $region60
      $region59: #{tpu_custom_call.1} parent=5 // pred_region
        %s336 = ssub.s32 %s24, 1
        %s337 = sand.u32 %s37, 1
        %s338 = scalar_lea.sflag [#allocation5], %s337
        %s339 = sand.u32 %s37, 1
        %s340 = smul.addr %s339, 16
        %s341 = scalar_lea.vmem [#allocation4], %s340
        // Predicated region
        $region61: #{tpu_custom_call.1} parent=59 // pred_check
          %p342 = pneg %p50
        $region62: #{tpu_custom_call.1} parent=59 // pred_check_branch
          %344 = sbr.rel (%p342) target = $region64
        $region63: #{tpu_custom_call.1} parent=59 // pred_region
          %345 = dma.done %s338, 256
        $region64: #{tpu_custom_call.1} parent=59 // pred_fallthru
          _
        %s346 = sand.u32 %s37, 1
        %s347 = scalar_lea.sflag [#allocation5], %s346
        %s348 = sand.u32 %s37, 1
        %s349 = smul.addr %s348, 16
        %s350 = scalar_lea.vmem [#allocation4], %s349
        %p351 = pneg %p50
        %p352 = pneg %p47
        %p353 = pneg %p71
        %p354 = pneg %p68
        %p355 = pneg %p92
        %p356 = pneg %p89
        %p357 = pneg %p113
        %p358 = pneg %p110
        %p359 = pneg %p134
        %p360 = pneg %p131
        %p361 = pneg %p155
        %p362 = pneg %p152
        %p363 = pneg %p176
        %p364 = pneg %p173
        %p365 = pneg %p197
        %p366 = pneg %p194
        %p367 = pneg %p218
        %p368 = pneg %p215
        %p369 = pneg %p239
        %p370 = pneg %p236
        %p371 = pneg %p265
        %p372 = pneg %p262
        %s373 = sand.u32 %s252, 1
        %s374 = scalar_lea.sflag [#allocation6], %s373
        %s375 = sand.u32 %s252, 1
        %s376 = smul.addr %s375, 2
        %s377 = scalar_lea.vmem [#allocation7], %s376
        %378 = vst [vmem:[#allocation2] sm:$0xff] 0.0
        %379 = vst [vmem:[#allocation2 + $0x8] sm:$0xff] 0.0
        %380 = vst [vmem:[#allocation2 + $0x10] sm:$0xff] 0.0
        %381 = vst [vmem:[#allocation2 + $0x18] sm:$0xff] 0.0
        %382 = vst [vmem:[#allocation2 + $0x20] sm:$0xff] 0.0
        %383 = vst [vmem:[#allocation2 + $0x28] sm:$0xff] 0.0
        %v384 = vld [vmem:[%s341] sm:$0xff]
        %v385 = vld [vmem:[%s341 + $0x8] sm:$0xff]
        %386 = vst [vmem:[#allocation2 + $0x10] sm:$0xff] %v384
        %387 = vst [vmem:[#allocation2 + $0x18] sm:$0xff] %v385
        %v388 = vld [vmem:[#allocation2 + $0x10] sm:$0xff]
        %v389 = vld [vmem:[#allocation2 + $0x18] sm:$0xff]
        %v390 = vld [vmem:[#allocation2 + $0x20] sm:$0xff]
        %394 = vrot.lane.b32.xlu0 %v388, 127
        %v395 = vpop.permute.xlu0 %394
        %396 = vrot.lane.b32.xlu0 %v389, 127
        %v397 = vpop.permute.xlu0 %396
        %398 = vrot.lane.b32.xlu0 %v390, 127
        %v399 = vpop.permute.xlu0 %398
        %vm400 = vcmask 1039360
        %v401 = vsel %vm400, %v395, %v397
        %v402 = vsel %vm400, %v397, %v399
        %405 = vrot.lane.b32.xlu0 %v388, 126
        %v406 = vpop.permute.xlu0 %405
        %407 = vrot.lane.b32.xlu0 %v389, 126
        %v408 = vpop.permute.xlu0 %407
        %409 = vrot.lane.b32.xlu0 %v390, 126
        %v410 = vpop.permute.xlu0 %409
        %vm411 = vcmask 1031168
        %v412 = vsel %vm411, %v406, %v408
        %v413 = vsel %vm411, %v408, %v410
        %416 = vrot.lane.b32.xlu0 %v388, 112
        %v417 = vpop.permute.xlu0 %416
        %418 = vrot.lane.b32.xlu0 %v389, 112
        %v419 = vpop.permute.xlu0 %418
        %420 = vrot.lane.b32.xlu0 %v390, 112
        %v421 = vpop.permute.xlu0 %420
        %vm422 = vcmask 916480
        %v423 = vsel %vm422, %v417, %v419
        %v424 = vsel %vm422, %v419, %v421
        %427 = vrot.lane.b32.xlu0 %v388, 111
        %v428 = vpop.permute.xlu0 %427
        %429 = vrot.lane.b32.xlu0 %v389, 111
        %v430 = vpop.permute.xlu0 %429
        %431 = vrot.lane.b32.xlu0 %v390, 111
        %v432 = vpop.permute.xlu0 %431
        %vm433 = vcmask 908288
        %v434 = vsel %vm433, %v428, %v430
        %v435 = vsel %vm433, %v430, %v432
        %438 = vrot.lane.b32.xlu0 %v388, 110
        %v439 = vpop.permute.xlu0 %438
        %440 = vrot.lane.b32.xlu0 %v389, 110
        %v441 = vpop.permute.xlu0 %440
        %442 = vrot.lane.b32.xlu0 %v390, 110
        %v443 = vpop.permute.xlu0 %442
        %vm444 = vcmask 900096
        %v445 = vsel %vm444, %v439, %v441
        %v446 = vsel %vm444, %v441, %v443
        %449 = vrot.lane.b32.xlu0 %v388, 96
        %v450 = vpop.permute.xlu0 %449
        %451 = vrot.lane.b32.xlu0 %v389, 96
        %v452 = vpop.permute.xlu0 %451
        %453 = vrot.lane.b32.xlu0 %v390, 96
        %v454 = vpop.permute.xlu0 %453
        %vm455 = vcmask 785408
        %v456 = vsel %vm455, %v450, %v452
        %v457 = vsel %vm455, %v452, %v454
        %460 = vrot.lane.b32.xlu0 %v388, 95
        %v461 = vpop.permute.xlu0 %460
        %462 = vrot.lane.b32.xlu0 %v389, 95
        %v463 = vpop.permute.xlu0 %462
        %464 = vrot.lane.b32.xlu0 %v390, 95
        %v465 = vpop.permute.xlu0 %464
        %vm466 = vcmask 777216
        %v467 = vsel %vm466, %v461, %v463
        %v468 = vsel %vm466, %v463, %v465
        %471 = vrot.lane.b32.xlu0 %v388, 94
        %v472 = vpop.permute.xlu0 %471
        %473 = vrot.lane.b32.xlu0 %v389, 94
        %v474 = vpop.permute.xlu0 %473
        %475 = vrot.lane.b32.xlu0 %v390, 94
        %v476 = vpop.permute.xlu0 %475
        %vm477 = vcmask 769024
        %v478 = vsel %vm477, %v472, %v474
        %v479 = vsel %vm477, %v474, %v476
        %v482 = vld [vmem:[%s2] sm:$0xff]
        %v483 = vld [vmem:[%s3] sm:$0xff]
        %485 = vset.pattern.permute.xlu0 0
        %486 = vperm.xlu0 %485, %v483
        %v487 = vpop.permute.xlu0 %486
        %vm489 = vcmask 588800
        %v491 = vsel %vm489, %v482, 0
        %493 = vmatprep.subr.mxu0 0.0
        %494 = vmatpush1.msra.mxu0 0.0
        %495 = vmatprep.subr.mxu0 0.0
        %496 = vmatpush1.msra.mxu0 0.0
        %497 = vmatprep.subr.mxu0 0.0
        %498 = vmatpush1.msra.mxu0 0.0
        %499 = vmatprep.subr.mxu0 0.0
        %500 = vmatpush1.msra.mxu0 0.0
        %501 = vmatprep.subr.mxu0 0.0
        %502 = vmatpush1.msra.mxu0 0.0
        %503 = vmatprep.subr.mxu0 0.0
        %504 = vmatpush1.msra.mxu0 0.0
        %505 = vmatprep.subr.mxu0 0.0
        %506 = vmatpush1.msra.mxu0 0.0
        %507 = vmatprep.subr.mxu0 %v479
        %508 = vmatpush1.msra.mxu0 %v478
        %509 = vmatprep.subr.mxu0 %v468
        %510 = vmatpush1.msra.mxu0 %v467
        %511 = vmatprep.subr.mxu0 %v457
        %512 = vmatpush1.msra.mxu0 %v456
        %513 = vmatprep.subr.mxu0 %v446
        %514 = vmatpush1.msra.mxu0 %v445
        %515 = vmatprep.subr.mxu0 %v435
        %516 = vmatpush1.msra.mxu0 %v434
        %517 = vmatprep.subr.mxu0 %v424
        %518 = vmatpush1.msra.mxu0 %v423
        %519 = vmatprep.subr.mxu0 %v413
        %520 = vmatpush1.msra.mxu0 %v412
        %521 = vmatprep.subr.mxu0 %v402
        %522 = vmatpush1.msra.mxu0 %v401
        %523 = vmatprep.subr.mxu0 %v389
        %524 = vmatpush1.msra.mxu0 %v388
        %525 = vmatprep.subr.mxu0 0.0
        %526 = vmatpush2.msra.mxu0 0.0
        %527 = vmatprep.subr.mxu0 0.0
        %528 = vmatpush2.msra.mxu0 0.0
        %529 = vmatprep.subr.mxu0 0.0
        %530 = vmatpush2.msra.mxu0 0.0
        %531 = vmatprep.subr.mxu0 0.0
        %532 = vmatpush2.msra.mxu0 0.0
        %533 = vmatprep.subr.mxu0 0.0
        %534 = vmatpush2.msra.mxu0 0.0
        %535 = vmatprep.subr.mxu0 0.0
        %536 = vmatpush2.msra.mxu0 0.0
        %537 = vmatprep.subr.mxu0 0.0
        %538 = vmatpush2.msra.mxu0 0.0
        %539 = vmatprep.subr.mxu0 0.0
        %540 = vmatpush2.msra.mxu0 0.0
        %541 = vmatprep.subr.mxu0 0.0
        %542 = vmatpush2.msra.mxu0 0.0
        %543 = vmatprep.subr.mxu0 0.0
        %544 = vmatpush2.msra.mxu0 0.0
        %545 = vmatprep.subr.mxu0 0.0
        %546 = vmatpush2.msra.mxu0 0.0
        %547 = vmatprep.subr.mxu0 0.0
        %548 = vmatpush2.msra.mxu0 0.0
        %549 = vmatprep.subr.mxu0 0.0
        %550 = vmatpush2.msra.mxu0 0.0
        %551 = vmatprep.subr.mxu0 0.0
        %552 = vmatpush2.msra.mxu0 0.0
        %553 = vmatprep.subr.mxu0 0.0
        %554 = vmatpush2.msra.mxu0 0.0
        %555 = vmatprep.subr.mxu0 0.0
        %556 = vmatpush2.msra.mxu0 0.0
        %557 = vmatprep.mubr.f32.mxu0 0.0
        %558 = vmatmul.mubr.f32.gmra.mxu0 %v491
        %v559 = vpop.f32.mrf.mxu0
        %v560 = vadd.f32 %v487, %v559
        %v561 = vpop.f32.mrf.mxu0
        %v562 = vadd.f32 %v487, %v561
        %563 = vdwg.mxu0
        %v564 = vmax.f32 %v560, 0.0
        %v565 = vmax.f32 %v562, 0.0
        %v566 = vld [vmem:[%s1] sm:$0x3]
        %v568 = vlaneseq
        %v569 = vshrl.u32 %v568, 7
        %v570 = vsub.s32 0, %v569
        %v571 = vrot.slane %v566, %v570
        %v572 = vlaneseq
        %v573 = vshrl.u32 %v572, 7
        %v574 = vsub.s32 1, %v573
        %v575 = vrot.slane %v566, %v574
        %v578 = vmul.f32 %v564, %v571
        %v579 = vmul.f32 %v565, %v575
        %580 = vst [vmem:[#allocation2 + $0x10] sm:$0xff] %v578
        %581 = vst [vmem:[#allocation2 + $0x18] sm:$0xff] %v579
        %v582 = vld [vmem:[#allocation2 + $0x10] sm:$0xff]
        %v583 = vld [vmem:[#allocation2 + $0x18] sm:$0xff]
        %v584 = vld [vmem:[#allocation2 + $0x20] sm:$0xff]
        %588 = vrot.lane.b32.xlu0 %v582, 127
        %v589 = vpop.permute.xlu0 %588
        %590 = vrot.lane.b32.xlu0 %v583, 127
        %v591 = vpop.permute.xlu0 %590
        %592 = vrot.lane.b32.xlu0 %v584, 127
        %v593 = vpop.permute.xlu0 %592
        %v594 = vsel %vm400, %v589, %v591
        %v595 = vsel %vm400, %v591, %v593
        %598 = vrot.lane.b32.xlu0 %v582, 126
        %v599 = vpop.permute.xlu0 %598
        %600 = vrot.lane.b32.xlu0 %v583, 126
        %v601 = vpop.permute.xlu0 %600
        %602 = vrot.lane.b32.xlu0 %v584, 126
        %v603 = vpop.permute.xlu0 %602
        %v604 = vsel %vm411, %v599, %v601
        %v605 = vsel %vm411, %v601, %v603
        %608 = vrot.lane.b32.xlu0 %v582, 112
        %v609 = vpop.permute.xlu0 %608
        %610 = vrot.lane.b32.xlu0 %v583, 112
        %v611 = vpop.permute.xlu0 %610
        %612 = vrot.lane.b32.xlu0 %v584, 112
        %v613 = vpop.permute.xlu0 %612
        %v614 = vsel %vm422, %v609, %v611
        %v615 = vsel %vm422, %v611, %v613
        %618 = vrot.lane.b32.xlu0 %v582, 111
        %v619 = vpop.permute.xlu0 %618
        %620 = vrot.lane.b32.xlu0 %v583, 111
        %v621 = vpop.permute.xlu0 %620
        %622 = vrot.lane.b32.xlu0 %v584, 111
        %v623 = vpop.permute.xlu0 %622
        %v624 = vsel %vm433, %v619, %v621
        %v625 = vsel %vm433, %v621, %v623
        %628 = vrot.lane.b32.xlu0 %v582, 110
        %v629 = vpop.permute.xlu0 %628
        %630 = vrot.lane.b32.xlu0 %v583, 110
        %v631 = vpop.permute.xlu0 %630
        %632 = vrot.lane.b32.xlu0 %v584, 110
        %v633 = vpop.permute.xlu0 %632
        %v634 = vsel %vm444, %v629, %v631
        %v635 = vsel %vm444, %v631, %v633
        %638 = vrot.lane.b32.xlu0 %v582, 96
        %v639 = vpop.permute.xlu0 %638
        %640 = vrot.lane.b32.xlu0 %v583, 96
        %v641 = vpop.permute.xlu0 %640
        %642 = vrot.lane.b32.xlu0 %v584, 96
        %v643 = vpop.permute.xlu0 %642
        %v644 = vsel %vm455, %v639, %v641
        %v645 = vsel %vm455, %v641, %v643
        %648 = vrot.lane.b32.xlu0 %v582, 95
        %v649 = vpop.permute.xlu0 %648
        %650 = vrot.lane.b32.xlu0 %v583, 95
        %v651 = vpop.permute.xlu0 %650
        %652 = vrot.lane.b32.xlu0 %v584, 95
        %v653 = vpop.permute.xlu0 %652
        %v654 = vsel %vm466, %v649, %v651
        %v655 = vsel %vm466, %v651, %v653
        %658 = vrot.lane.b32.xlu0 %v582, 94
        %v659 = vpop.permute.xlu0 %658
        %660 = vrot.lane.b32.xlu0 %v583, 94
        %v661 = vpop.permute.xlu0 %660
        %662 = vrot.lane.b32.xlu0 %v584, 94
        %v663 = vpop.permute.xlu0 %662
        %v664 = vsel %vm477, %v659, %v661
        %v665 = vsel %vm477, %v661, %v663
        %v668 = vld [vmem:[%s4] sm:$0xff]
        %v669 = vld [vmem:[%s5] sm:$0xff]
        %671 = vset.pattern.permute.xlu0 0
        %672 = vperm.xlu0 %671, %v669
        %v673 = vpop.permute.xlu0 %672
        %v676 = vsel %vm489, %v668, 0
        %678 = vmatprep.subr.mxu0 0.0
        %679 = vmatpush1.msra.mxu0 0.0
        %680 = vmatprep.subr.mxu0 0.0
        %681 = vmatpush1.msra.mxu0 0.0
        %682 = vmatprep.subr.mxu0 0.0
        %683 = vmatpush1.msra.mxu0 0.0
        %684 = vmatprep.subr.mxu0 0.0
        %685 = vmatpush1.msra.mxu0 0.0
        %686 = vmatprep.subr.mxu0 0.0
        %687 = vmatpush1.msra.mxu0 0.0
        %688 = vmatprep.subr.mxu0 0.0
        %689 = vmatpush1.msra.mxu0 0.0
        %690 = vmatprep.subr.mxu0 0.0
        %691 = vmatpush1.msra.mxu0 0.0
        %692 = vmatprep.subr.mxu0 %v665
        %693 = vmatpush1.msra.mxu0 %v664
        %694 = vmatprep.subr.mxu0 %v655
        %695 = vmatpush1.msra.mxu0 %v654
        %696 = vmatprep.subr.mxu0 %v645
        %697 = vmatpush1.msra.mxu0 %v644
        %698 = vmatprep.subr.mxu0 %v635
        %699 = vmatpush1.msra.mxu0 %v634
        %700 = vmatprep.subr.mxu0 %v625
        %701 = vmatpush1.msra.mxu0 %v624
        %702 = vmatprep.subr.mxu0 %v615
        %703 = vmatpush1.msra.mxu0 %v614
        %704 = vmatprep.subr.mxu0 %v605
        %705 = vmatpush1.msra.mxu0 %v604
        %706 = vmatprep.subr.mxu0 %v595
        %707 = vmatpush1.msra.mxu0 %v594
        %708 = vmatprep.subr.mxu0 %v583
        %709 = vmatpush1.msra.mxu0 %v582
        %710 = vmatprep.subr.mxu0 0.0
        %711 = vmatpush2.msra.mxu0 0.0
        %712 = vmatprep.subr.mxu0 0.0
        %713 = vmatpush2.msra.mxu0 0.0
        %714 = vmatprep.subr.mxu0 0.0
        %715 = vmatpush2.msra.mxu0 0.0
        %716 = vmatprep.subr.mxu0 0.0
        %717 = vmatpush2.msra.mxu0 0.0
        %718 = vmatprep.subr.mxu0 0.0
        %719 = vmatpush2.msra.mxu0 0.0
        %720 = vmatprep.subr.mxu0 0.0
        %721 = vmatpush2.msra.mxu0 0.0
        %722 = vmatprep.subr.mxu0 0.0
        %723 = vmatpush2.msra.mxu0 0.0
        %724 = vmatprep.subr.mxu0 0.0
        %725 = vmatpush2.msra.mxu0 0.0
        %726 = vmatprep.subr.mxu0 0.0
        %727 = vmatpush2.msra.mxu0 0.0
        %728 = vmatprep.subr.mxu0 0.0
        %729 = vmatpush2.msra.mxu0 0.0
        %730 = vmatprep.subr.mxu0 0.0
        %731 = vmatpush2.msra.mxu0 0.0
        %732 = vmatprep.subr.mxu0 0.0
        %733 = vmatpush2.msra.mxu0 0.0
        %734 = vmatprep.subr.mxu0 0.0
        %735 = vmatpush2.msra.mxu0 0.0
        %736 = vmatprep.subr.mxu0 0.0
        %737 = vmatpush2.msra.mxu0 0.0
        %738 = vmatprep.subr.mxu0 0.0
        %739 = vmatpush2.msra.mxu0 0.0
        %740 = vmatprep.subr.mxu0 0.0
        %741 = vmatpush2.msra.mxu0 0.0
        %742 = vmatprep.mubr.f32.mxu0 0.0
        %743 = vmatmul.mubr.f32.gmra.mxu0 %v676
        %v744 = vpop.f32.mrf.mxu0
        %v745 = vadd.f32 %v673, %v744
        %v746 = vpop.f32.mrf.mxu0
        %v747 = vadd.f32 %v673, %v746
        %748 = vdwg.mxu0
        %v749 = vmax.f32 %v745, 0.0
        %v750 = vmax.f32 %v747, 0.0
        %s751 = scalar_lea.vmem %s1, 2
        %v752 = vld [vmem:[%s751] sm:$0x3]
        %v754 = vlaneseq
        %v755 = vshrl.u32 %v754, 7
        %v756 = vsub.s32 0, %v755
        %v757 = vrot.slane %v752, %v756
        %v758 = vlaneseq
        %v759 = vshrl.u32 %v758, 7
        %v760 = vsub.s32 1, %v759
        %v761 = vrot.slane %v752, %v760
        %v764 = vmul.f32 %v749, %v757
        %v765 = vmul.f32 %v750, %v761
        %766 = vst [vmem:[#allocation2 + $0x10] sm:$0xff] %v764
        %767 = vst [vmem:[#allocation2 + $0x18] sm:$0xff] %v765
        %v768 = vld [vmem:[#allocation2 + $0x10] sm:$0xff]
        %v769 = vld [vmem:[#allocation2 + $0x18] sm:$0xff]
        %v770 = vld [vmem:[#allocation2 + $0x20] sm:$0xff]
        %774 = vrot.lane.b32.xlu0 %v768, 127
        %v775 = vpop.permute.xlu0 %774
        %776 = vrot.lane.b32.xlu0 %v769, 127
        %v777 = vpop.permute.xlu0 %776
        %778 = vrot.lane.b32.xlu0 %v770, 127
        %v779 = vpop.permute.xlu0 %778
        %v780 = vsel %vm400, %v775, %v777
        %v781 = vsel %vm400, %v777, %v779
        %784 = vrot.lane.b32.xlu0 %v768, 126
        %v785 = vpop.permute.xlu0 %784
        %786 = vrot.lane.b32.xlu0 %v769, 126
        %v787 = vpop.permute.xlu0 %786
        %788 = vrot.lane.b32.xlu0 %v770, 126
        %v789 = vpop.permute.xlu0 %788
        %v790 = vsel %vm411, %v785, %v787
        %v791 = vsel %vm411, %v787, %v789
        %794 = vrot.lane.b32.xlu0 %v768, 112
        %v795 = vpop.permute.xlu0 %794
        %796 = vrot.lane.b32.xlu0 %v769, 112
        %v797 = vpop.permute.xlu0 %796
        %798 = vrot.lane.b32.xlu0 %v770, 112
        %v799 = vpop.permute.xlu0 %798
        %v800 = vsel %vm422, %v795, %v797
        %v801 = vsel %vm422, %v797, %v799
        %804 = vrot.lane.b32.xlu0 %v768, 111
        %v805 = vpop.permute.xlu0 %804
        %806 = vrot.lane.b32.xlu0 %v769, 111
        %v807 = vpop.permute.xlu0 %806
        %808 = vrot.lane.b32.xlu0 %v770, 111
        %v809 = vpop.permute.xlu0 %808
        %v810 = vsel %vm433, %v805, %v807
        %v811 = vsel %vm433, %v807, %v809
        %814 = vrot.lane.b32.xlu0 %v768, 110
        %v815 = vpop.permute.xlu0 %814
        %816 = vrot.lane.b32.xlu0 %v769, 110
        %v817 = vpop.permute.xlu0 %816
        %818 = vrot.lane.b32.xlu0 %v770, 110
        %v819 = vpop.permute.xlu0 %818
        %v820 = vsel %vm444, %v815, %v817
        %v821 = vsel %vm444, %v817, %v819
        %824 = vrot.lane.b32.xlu0 %v768, 96
        %v825 = vpop.permute.xlu0 %824
        %826 = vrot.lane.b32.xlu0 %v769, 96
        %v827 = vpop.permute.xlu0 %826
        %828 = vrot.lane.b32.xlu0 %v770, 96
        %v829 = vpop.permute.xlu0 %828
        %v830 = vsel %vm455, %v825, %v827
        %v831 = vsel %vm455, %v827, %v829
        %834 = vrot.lane.b32.xlu0 %v768, 95
        %v835 = vpop.permute.xlu0 %834
        %836 = vrot.lane.b32.xlu0 %v769, 95
        %v837 = vpop.permute.xlu0 %836
        %838 = vrot.lane.b32.xlu0 %v770, 95
        %v839 = vpop.permute.xlu0 %838
        %v840 = vsel %vm466, %v835, %v837
        %v841 = vsel %vm466, %v837, %v839
        %844 = vrot.lane.b32.xlu0 %v768, 94
        %v845 = vpop.permute.xlu0 %844
        %846 = vrot.lane.b32.xlu0 %v769, 94
        %v847 = vpop.permute.xlu0 %846
        %848 = vrot.lane.b32.xlu0 %v770, 94
        %v849 = vpop.permute.xlu0 %848
        %v850 = vsel %vm477, %v845, %v847
        %v851 = vsel %vm477, %v847, %v849
        %v854 = vld [vmem:[%s6] sm:$0xff]
        %v855 = vld [vmem:[%s7] sm:$0xff]
        %857 = vset.pattern.permute.xlu0 0
        %858 = vperm.xlu0 %857, %v855
        %v859 = vpop.permute.xlu0 %858
        %v862 = vsel %vm489, %v854, 0
        %864 = vmatprep.subr.mxu0 0.0
        %865 = vmatpush1.msra.mxu0 0.0
        %866 = vmatprep.subr.mxu0 0.0
        %867 = vmatpush1.msra.mxu0 0.0
        %868 = vmatprep.subr.mxu0 0.0
        %869 = vmatpush1.msra.mxu0 0.0
        %870 = vmatprep.subr.mxu0 0.0
        %871 = vmatpush1.msra.mxu0 0.0
        %872 = vmatprep.subr.mxu0 0.0
        %873 = vmatpush1.msra.mxu0 0.0
        %874 = vmatprep.subr.mxu0 0.0
        %875 = vmatpush1.msra.mxu0 0.0
        %876 = vmatprep.subr.mxu0 0.0
        %877 = vmatpush1.msra.mxu0 0.0
        %878 = vmatprep.subr.mxu0 %v851
        %879 = vmatpush1.msra.mxu0 %v850
        %880 = vmatprep.subr.mxu0 %v841
        %881 = vmatpush1.msra.mxu0 %v840
        %882 = vmatprep.subr.mxu0 %v831
        %883 = vmatpush1.msra.mxu0 %v830
        %884 = vmatprep.subr.mxu0 %v821
        %885 = vmatpush1.msra.mxu0 %v820
        %886 = vmatprep.subr.mxu0 %v811
        %887 = vmatpush1.msra.mxu0 %v810
        %888 = vmatprep.subr.mxu0 %v801
        %889 = vmatpush1.msra.mxu0 %v800
        %890 = vmatprep.subr.mxu0 %v791
        %891 = vmatpush1.msra.mxu0 %v790
        %892 = vmatprep.subr.mxu0 %v781
        %893 = vmatpush1.msra.mxu0 %v780
        %894 = vmatprep.subr.mxu0 %v769
        %895 = vmatpush1.msra.mxu0 %v768
        %896 = vmatprep.subr.mxu0 0.0
        %897 = vmatpush2.msra.mxu0 0.0
        %898 = vmatprep.subr.mxu0 0.0
        %899 = vmatpush2.msra.mxu0 0.0
        %900 = vmatprep.subr.mxu0 0.0
        %901 = vmatpush2.msra.mxu0 0.0
        %902 = vmatprep.subr.mxu0 0.0
        %903 = vmatpush2.msra.mxu0 0.0
        %904 = vmatprep.subr.mxu0 0.0
        %905 = vmatpush2.msra.mxu0 0.0
        %906 = vmatprep.subr.mxu0 0.0
        %907 = vmatpush2.msra.mxu0 0.0
        %908 = vmatprep.subr.mxu0 0.0
        %909 = vmatpush2.msra.mxu0 0.0
        %910 = vmatprep.subr.mxu0 0.0
        %911 = vmatpush2.msra.mxu0 0.0
        %912 = vmatprep.subr.mxu0 0.0
        %913 = vmatpush2.msra.mxu0 0.0
        %914 = vmatprep.subr.mxu0 0.0
        %915 = vmatpush2.msra.mxu0 0.0
        %916 = vmatprep.subr.mxu0 0.0
        %917 = vmatpush2.msra.mxu0 0.0
        %918 = vmatprep.subr.mxu0 0.0
        %919 = vmatpush2.msra.mxu0 0.0
        %920 = vmatprep.subr.mxu0 0.0
        %921 = vmatpush2.msra.mxu0 0.0
        %922 = vmatprep.subr.mxu0 0.0
        %923 = vmatpush2.msra.mxu0 0.0
        %924 = vmatprep.subr.mxu0 0.0
        %925 = vmatpush2.msra.mxu0 0.0
        %926 = vmatprep.subr.mxu0 0.0
        %927 = vmatpush2.msra.mxu0 0.0
        %928 = vmatprep.mubr.f32.mxu0 0.0
        %929 = vmatmul.mubr.f32.gmra.mxu0 %v862
        %v930 = vpop.f32.mrf.mxu0
        %v931 = vadd.f32 %v859, %v930
        %v932 = vpop.f32.mrf.mxu0
        %v933 = vadd.f32 %v859, %v932
        %934 = vdwg.mxu0
        %v935 = vmax.f32 %v931, 0.0
        %v936 = vmax.f32 %v933, 0.0
        %s937 = scalar_lea.vmem %s1, 4
        %v938 = vld [vmem:[%s937] sm:$0x3]
        %v940 = vlaneseq
        %v941 = vshrl.u32 %v940, 7
        %v942 = vsub.s32 0, %v941
        %v943 = vrot.slane %v938, %v942
        %v944 = vlaneseq
        %v945 = vshrl.u32 %v944, 7
        %v946 = vsub.s32 1, %v945
        %v947 = vrot.slane %v938, %v946
        %v950 = vmul.f32 %v935, %v943
        %v951 = vmul.f32 %v936, %v947
        %952 = vst [vmem:[#allocation2 + $0x10] sm:$0xff] %v950
        %953 = vst [vmem:[#allocation2 + $0x18] sm:$0xff] %v951
        %v954 = vld [vmem:[#allocation2 + $0x8] sm:$0xff]
        %v955 = vld [vmem:[#allocation2 + $0x10] sm:$0xff]
        %v956 = vld [vmem:[#allocation2 + $0x18] sm:$0xff]
        %v957 = vld [vmem:[#allocation2 + $0x20] sm:$0xff]
        %961 = vrot.lane.b32.xlu0 %v954, 127
        %v962 = vpop.permute.xlu0 %961
        %963 = vrot.lane.b32.xlu0 %v955, 127
        %v964 = vpop.permute.xlu0 %963
        %965 = vrot.lane.b32.xlu0 %v956, 127
        %v966 = vpop.permute.xlu0 %965
        %v967 = vsel %vm400, %v962, %v964
        %v968 = vsel %vm400, %v964, %v966
        %969 = vrot.lane.b32.xlu0 %v954, 126
        %v970 = vpop.permute.xlu0 %969
        %971 = vrot.lane.b32.xlu0 %v955, 126
        %v972 = vpop.permute.xlu0 %971
        %973 = vrot.lane.b32.xlu0 %v956, 126
        %v974 = vpop.permute.xlu0 %973
        %v975 = vsel %vm411, %v970, %v972
        %v976 = vsel %vm411, %v972, %v974
        %977 = vrot.lane.b32.xlu0 %v954, 112
        %v978 = vpop.permute.xlu0 %977
        %979 = vrot.lane.b32.xlu0 %v955, 112
        %v980 = vpop.permute.xlu0 %979
        %981 = vrot.lane.b32.xlu0 %v956, 112
        %v982 = vpop.permute.xlu0 %981
        %v983 = vsel %vm422, %v978, %v980
        %v984 = vsel %vm422, %v980, %v982
        %985 = vrot.lane.b32.xlu0 %v955, 111
        %v986 = vpop.permute.xlu0 %985
        %987 = vrot.lane.b32.xlu0 %v956, 111
        %v988 = vpop.permute.xlu0 %987
        %v989 = vsel %vm433, %v986, %v988
        %991 = vrot.lane.b32.xlu0 %v955, 110
        %v992 = vpop.permute.xlu0 %991
        %993 = vrot.lane.b32.xlu0 %v956, 110
        %v994 = vpop.permute.xlu0 %993
        %995 = vrot.lane.b32.xlu0 %v957, 110
        %v996 = vpop.permute.xlu0 %995
        %v997 = vsel %vm444, %v992, %v994
        %v998 = vsel %vm444, %v994, %v996
        %999 = vrot.lane.b32.xlu0 %v955, 96
        %v1000 = vpop.permute.xlu0 %999
        %1001 = vrot.lane.b32.xlu0 %v956, 96
        %v1002 = vpop.permute.xlu0 %1001
        %1003 = vrot.lane.b32.xlu0 %v957, 96
        %v1004 = vpop.permute.xlu0 %1003
        %v1005 = vsel %vm455, %v1000, %v1002
        %v1006 = vsel %vm455, %v1002, %v1004
        %1007 = vrot.lane.b32.xlu0 %v955, 95
        %v1008 = vpop.permute.xlu0 %1007
        %1009 = vrot.lane.b32.xlu0 %v956, 95
        %v1010 = vpop.permute.xlu0 %1009
        %1011 = vrot.lane.b32.xlu0 %v957, 95
        %v1012 = vpop.permute.xlu0 %1011
        %v1013 = vsel %vm466, %v1008, %v1010
        %v1014 = vsel %vm466, %v1010, %v1012
        %1015 = vrot.lane.b32.xlu0 %v955, 94
        %v1016 = vpop.permute.xlu0 %1015
        %1017 = vrot.lane.b32.xlu0 %v956, 94
        %v1018 = vpop.permute.xlu0 %1017
        %1019 = vrot.lane.b32.xlu0 %v957, 94
        %v1020 = vpop.permute.xlu0 %1019
        %v1021 = vsel %vm477, %v1016, %v1018
        %v1022 = vsel %vm477, %v1018, %v1020
        %v1023 = vld [vmem:[%s8] sm:$0x1]
        %v1024 = vld [vmem:[#allocation3] sm:$0x1]
        %1026 = vset.pattern.permute.xlu0 0
        %1027 = vperm.xlu0 %1026, %v1024
        %v1028 = vpop.permute.xlu0 %1027
        %v1030 = vlaneseq
        %v1031 = vshrl.u32 %v1030, 7
        %v1032 = vsub.s32 0, %v1031
        %v1033 = vrot.slane %v1028, %v1032
        %1034 = vrot.lane.b32.xlu0 %v954, 17
        %v1035 = vpop.permute.xlu0 %1034
        %1036 = vrot.lane.b32.xlu0 %v955, 17
        %v1037 = vpop.permute.xlu0 %1036
        %1038 = vrot.lane.b32.xlu0 %v956, 17
        %v1039 = vpop.permute.xlu0 %1038
        %1040 = vrot.lane.b32.xlu0 %v967, 17
        %v1041 = vpop.permute.xlu0 %1040
        %1042 = vrot.lane.b32.xlu0 %v968, 17
        %v1043 = vpop.permute.xlu0 %1042
        %1044 = vrot.lane.b32.xlu0 %v966, 17
        %v1045 = vpop.permute.xlu0 %1044
        %1046 = vrot.lane.b32.xlu0 %v975, 17
        %v1047 = vpop.permute.xlu0 %1046
        %1048 = vrot.lane.b32.xlu0 %v976, 17
        %v1049 = vpop.permute.xlu0 %1048
        %1050 = vrot.lane.b32.xlu0 %v974, 17
        %v1051 = vpop.permute.xlu0 %1050
        %1052 = vrot.lane.b32.xlu0 %v983, 17
        %v1053 = vpop.permute.xlu0 %1052
        %1054 = vrot.lane.b32.xlu0 %v984, 17
        %v1055 = vpop.permute.xlu0 %1054
        %1056 = vrot.lane.b32.xlu0 %v982, 17
        %v1057 = vpop.permute.xlu0 %1056
        %1058 = vrot.lane.b32.xlu0 %v986, 17
        %v1059 = vpop.permute.xlu0 %1058
        %1060 = vrot.lane.b32.xlu0 %v989, 17
        %v1061 = vpop.permute.xlu0 %1060
        %1062 = vrot.lane.b32.xlu0 %v988, 17
        %v1063 = vpop.permute.xlu0 %1062
        %1064 = vrot.lane.b32.xlu0 %v992, 17
        %v1065 = vpop.permute.xlu0 %1064
        %1066 = vrot.lane.b32.xlu0 %v997, 17
        %v1067 = vpop.permute.xlu0 %1066
        %1068 = vrot.lane.b32.xlu0 %v998, 17
        %v1069 = vpop.permute.xlu0 %1068
        %1070 = vrot.lane.b32.xlu0 %v1000, 17
        %v1071 = vpop.permute.xlu0 %1070
        %1072 = vrot.lane.b32.xlu0 %v1005, 17
        %v1073 = vpop.permute.xlu0 %1072
        %1074 = vrot.lane.b32.xlu0 %v1006, 17
        %v1075 = vpop.permute.xlu0 %1074
        %1076 = vrot.lane.b32.xlu0 %v1008, 17
        %v1077 = vpop.permute.xlu0 %1076
        %1078 = vrot.lane.b32.xlu0 %v1013, 17
        %v1079 = vpop.permute.xlu0 %1078
        %1080 = vrot.lane.b32.xlu0 %v1014, 17
        %v1081 = vpop.permute.xlu0 %1080
        %1082 = vrot.lane.b32.xlu0 %v1016, 17
        %v1083 = vpop.permute.xlu0 %1082
        %1084 = vrot.lane.b32.xlu0 %v1021, 17
        %v1085 = vpop.permute.xlu0 %1084
        %1086 = vrot.lane.b32.xlu0 %v1022, 17
        %v1087 = vpop.permute.xlu0 %1086
        %vm1088 = vcmask 138240
        %v1089 = vsel %vm1088, %v1035, %v1037
        %v1090 = vsel %vm1088, %v1037, %v1039
        %v1091 = vsel %vm1088, %v1041, %v1043
        %v1092 = vsel %vm1088, %v1043, %v1045
        %v1093 = vsel %vm1088, %v1047, %v1049
        %v1094 = vsel %vm1088, %v1049, %v1051
        %v1095 = vsel %vm1088, %v1053, %v1055
        %v1096 = vsel %vm1088, %v1055, %v1057
        %v1097 = vsel %vm1088, %v1059, %v1061
        %v1098 = vsel %vm1088, %v1061, %v1063
        %v1099 = vsel %vm1088, %v1065, %v1067
        %v1100 = vsel %vm1088, %v1067, %v1069
        %v1101 = vsel %vm1088, %v1071, %v1073
        %v1102 = vsel %vm1088, %v1073, %v1075
        %v1103 = vsel %vm1088, %v1077, %v1079
        %v1104 = vsel %vm1088, %v1079, %v1081
        %v1105 = vsel %vm1088, %v1083, %v1085
        %v1106 = vsel %vm1088, %v1085, %v1087
        %v1126 = vsel %vm489, %v1023, 0
        %1128 = vmatprep.subr.mxu0 0.0
        %1129 = vmatpush1.msra.mxu0 0.0
        %1130 = vmatprep.subr.mxu0 0.0
        %1131 = vmatpush1.msra.mxu0 0.0
        %1132 = vmatprep.subr.mxu0 0.0
        %1133 = vmatpush1.msra.mxu0 0.0
        %1134 = vmatprep.subr.mxu0 0.0
        %1135 = vmatpush1.msra.mxu0 0.0
        %1136 = vmatprep.subr.mxu0 0.0
        %1137 = vmatpush1.msra.mxu0 0.0
        %1138 = vmatprep.subr.mxu0 0.0
        %1139 = vmatpush1.msra.mxu0 0.0
        %1140 = vmatprep.subr.mxu0 0.0
        %1141 = vmatpush1.msra.mxu0 0.0
        %1142 = vmatprep.subr.mxu0 %v1106
        %1143 = vmatpush1.msra.mxu0 %v1105
        %1144 = vmatprep.subr.mxu0 %v1104
        %1145 = vmatpush1.msra.mxu0 %v1103
        %1146 = vmatprep.subr.mxu0 %v1102
        %1147 = vmatpush1.msra.mxu0 %v1101
        %1148 = vmatprep.subr.mxu0 %v1100
        %1149 = vmatpush1.msra.mxu0 %v1099
        %1150 = vmatprep.subr.mxu0 %v1098
        %1151 = vmatpush1.msra.mxu0 %v1097
        %1152 = vmatprep.subr.mxu0 %v1096
        %1153 = vmatpush1.msra.mxu0 %v1095
        %1154 = vmatprep.subr.mxu0 %v1094
        %1155 = vmatpush1.msra.mxu0 %v1093
        %1156 = vmatprep.subr.mxu0 %v1092
        %1157 = vmatpush1.msra.mxu0 %v1091
        %1158 = vmatprep.subr.mxu0 %v1090
        %1159 = vmatpush1.msra.mxu0 %v1089
        %1160 = vmatprep.subr.mxu0 0.0
        %1161 = vmatpush2.msra.mxu0 0.0
        %1162 = vmatprep.subr.mxu0 0.0
        %1163 = vmatpush2.msra.mxu0 0.0
        %1164 = vmatprep.subr.mxu0 0.0
        %1165 = vmatpush2.msra.mxu0 0.0
        %1166 = vmatprep.subr.mxu0 0.0
        %1167 = vmatpush2.msra.mxu0 0.0
        %1168 = vmatprep.subr.mxu0 0.0
        %1169 = vmatpush2.msra.mxu0 0.0
        %1170 = vmatprep.subr.mxu0 0.0
        %1171 = vmatpush2.msra.mxu0 0.0
        %1172 = vmatprep.subr.mxu0 0.0
        %1173 = vmatpush2.msra.mxu0 0.0
        %1174 = vmatprep.subr.mxu0 0.0
        %1175 = vmatpush2.msra.mxu0 0.0
        %1176 = vmatprep.subr.mxu0 0.0
        %1177 = vmatpush2.msra.mxu0 0.0
        %1178 = vmatprep.subr.mxu0 0.0
        %1179 = vmatpush2.msra.mxu0 0.0
        %1180 = vmatprep.subr.mxu0 0.0
        %1181 = vmatpush2.msra.mxu0 0.0
        %1182 = vmatprep.subr.mxu0 0.0
        %1183 = vmatpush2.msra.mxu0 0.0
        %1184 = vmatprep.subr.mxu0 0.0
        %1185 = vmatpush2.msra.mxu0 0.0
        %1186 = vmatprep.subr.mxu0 0.0
        %1187 = vmatpush2.msra.mxu0 0.0
        %1188 = vmatprep.subr.mxu0 0.0
        %1189 = vmatpush2.msra.mxu0 0.0
        %1190 = vmatprep.subr.mxu0 0.0
        %1191 = vmatpush2.msra.mxu0 0.0
        %1192 = vmatprep.mubr.f32.mxu0 0.0
        %1193 = vmatmul.mubr.f32.gmra.mxu0 %v1126
        %v1194 = vpop.f32.mrf.mxu0
        %v1195 = vadd.f32 %v1033, %v1194
        %v1196 = vpop.f32.mrf.mxu0
        %v1197 = vadd.f32 %v1033, %v1196
        %1198 = vdwg.mxu0
        %v1201 = vcombine.low %v1195, %v1197
        %v1203 = vunpack.c.l.s4 1966171168
        %v1204 = vunpack.c.0.s8 %v1203
        %v1205 = vlaneseq
        %v1206 = vshrl.u32 %v1205, 7
        %v1207 = vsub.s32 %v1204, %v1206
        %v1208 = vrot.slane %v1201, %v1207
        %v1210 = vunpack.c.l.s4 1966171168
        %v1211 = vunpack.c.0.s8 %v1210
        %v1212 = vlaneseq
        %v1213 = vshrl.u32 %v1212, 7
        %v1214 = vsub.s32 %v1211, %v1213
        %v1215 = vrot.slane %v1208, %v1214
        %v1217 = vlaneseq
        %vm1218 = vcmp.ge.s32.totalorder %v1217, 0
        %vm1219 = vcmp.lt.s32.totalorder %v1217, 256
        %vm1220 = vmand %vm1218, %vm1219
        %1221 = vst.msk [vmem:[%s377] sm:$0x3] %vm1220, %v1215
        %s1222 = sand.u32 %s252, 1
        %s1223 = scalar_lea.sflag [#allocation6], %s1222
        %s1224 = sand.u32 %s252, 1
        %s1225 = smul.addr %s1224, 2
        %s1226 = scalar_lea.vmem [#allocation7], %s1225
        // Predicated region
        $region65: #{tpu_custom_call.1} parent=59 // pred_check
          %p1227 = pneg %p262
        $region66: #{tpu_custom_call.1} parent=59 // pred_check_branch
          %1229 = sbr.rel (%p1227) target = $region68
        $region67: #{tpu_custom_call.1} parent=59 // pred_region
          %s1231 = ssub.s32 32, 32
          %1232 = vsyncadd %s1223, %s1231
          %s1233 = smul.addr %s29, 2
          %s1234 = smul.addr %s1233, 16
          %s1235 = scalar_lea.hbm %s10, %s1234
          %s1237 = sshll.u32 %s1226, 4
          %s1238 = int_to_ptr.vmem [resolvable:$true] %s1237
          %1240 = dma.vmem_to_hbm [thread:$0]  %s1238, 32, %s1235, %s1223
        $region68: #{tpu_custom_call.1} parent=59 // pred_fallthru
          _
      $region60: #{tpu_custom_call.1} parent=5 // pred_fallthru
        _
      %p1241 = scmp.le.s32.totalorder 2, %s24
      // Predicated region
      $region69: #{tpu_custom_call.1} parent=5 // pred_check
        %p1242 = pneg %p1241
      $region70: #{tpu_custom_call.1} parent=5 // pred_check_branch
        %1244 = sbr.rel (%p1242) target = $region72
      $region71: #{tpu_custom_call.1} parent=5 // pred_region
        %s1245 = ssub.s32 %s24, 2
        // Predicated region
        $region73: #{tpu_custom_call.1} parent=71 // pred_check
          %p1246 = pneg %p268
        $region74: #{tpu_custom_call.1} parent=71 // pred_check_branch
          %1248 = sbr.rel (%p1246) target = $region76
        $region75: #{tpu_custom_call.1} parent=71 // pred_region
          %s1249 = sand.u32 %s253, 1
          %s1250 = scalar_lea.sflag [#allocation6], %s1249
          %s1251 = sand.u32 %s253, 1
          %s1252 = smul.addr %s1251, 2
          %s1253 = scalar_lea.vmem [#allocation7], %s1252
          %1254 = dma.done %s1250, 32
        $region76: #{tpu_custom_call.1} parent=71 // pred_fallthru
          _
      $region72: #{tpu_custom_call.1} parent=5 // pred_fallthru
        _
    $region6: #{tpu_custom_call.1} parent=1 // loop_footer
      %s28 = sadd.s32 1, %s24
    $region7: #{tpu_custom_call.1} parent=1 // loop_footer_branch
      %23 = sbr.rel target = $region3
    $region8: #{tpu_custom_call.1} parent=1 // loop_exit
      _
    %1255 = vsyncpa [#allocation5], 1
    %s1256 = scalar_lea.sflag [#allocation5], 1
    %1257 = vsyncpa %s1256, 1
    %1258 = vsyncpa [#allocation6], 1
    %s1259 = scalar_lea.sflag [#allocation6], 1
    %1260 = vsyncpa %s1259, 1

</llo_original>
